<compile_context>
chip_gen: v7x
topology: tpu7x:2x2x1
jax: 0.10.0
libtpu: 0.0.40
codegen_flags: <defaults>
</compile_context>

<pallas_src>
import functools
import math

import jax
import jax.numpy as jnp
from jax.experimental import pallas as pl
from jax.experimental.pallas import tpu as pltpu


def _mha_kernel(x_ref, wq_ref, wk_ref, wv_ref, wf_ref,
                bq_ref, bk_ref, bv_ref, bf_ref, o_ref,
                *, num_heads: int, head_dim: int, seq_len: int,
                batch_tile: int, compute_dtype):
    nh, hd, S, bt = num_heads, head_dim, seq_len, batch_tile
    H = nh * hd
    cd = compute_dtype

    # One row-dense slab for all projections in this tile: (bt*S, H).
    x = x_ref[...].reshape(bt * S, H).astype(cd)

    # nn.Linear with host-pre-transposed weights (in, out): x @ W_t + b, f32 accumulation.
    q = jnp.dot(x, wq_ref[...].astype(cd), preferred_element_type=jnp.float32) + bq_ref[...]
    k = jnp.dot(x, wk_ref[...].astype(cd), preferred_element_type=jnp.float32) + bk_ref[...]
    v = jnp.dot(x, wv_ref[...].astype(cd), preferred_element_type=jnp.float32) + bv_ref[...]

    # Fold the 1/sqrt(head_dim) scale into q instead of scaling the (S, S) scores.
    q = q * (1.0 / math.sqrt(hd))

    def to_heads(t):
        # (S, H) -> (num_heads, S, head_dim): head-major layout for batched attention.
        return pltpu.einshape("shd->hsd", t.reshape(S, nh, hd))

    attn_rows = []
    for bi in range(bt):  # static loop: attention is grouped per batch element
        rows = slice(bi * S, (bi + 1) * S)
        qh = to_heads(q[rows]).astype(cd)
        kh = to_heads(k[rows]).astype(cd)
        vh = to_heads(v[rows]).astype(cd)

        # Scores batched over heads; contracts head_dim without materializing kh^T.
        s = jnp.einsum("hqd,hkd->hqk", qh, kh,
                       preferred_element_type=jnp.float32)              # (nh, S, S)
        # Numerically stable softmax in f32, reciprocal instead of divide.
        s = s - jnp.max(s, axis=-1, keepdims=True)
        p = jnp.exp(s)
        w = p * pl.reciprocal(jnp.sum(p, axis=-1, keepdims=True), approx=False)

        a = jnp.einsum("hqk,hkd->hqd", w.astype(cd), vh,
                       preferred_element_type=jnp.float32)              # (nh, S, hd)
        # Back to row-major (S, H); equivalent to torch.cat(torch.split(attn, B, 0), -1)
        # for this batch element.
        attn_rows.append(pltpu.einshape("hsd->shd", a).reshape(S, H))

    attn = attn_rows[0] if bt == 1 else jnp.concatenate(attn_rows, axis=0)   # (bt*S, H)

    out = jnp.dot(attn.astype(cd), wf_ref[...].astype(cd),
                  preferred_element_type=jnp.float32) + bf_ref[...]
    o_ref[...] = out.reshape(bt, S, H).astype(o_ref.dtype)


def mha_pallas(x, params, *, num_heads: int, batch_tile=None,
               compute_dtype=jnp.float32):
    """x: (B, S, H) float32. params: PyTorch nn.Linear layout (W: (out, in), b: (out,))."""
    B, S, H = x.shape
    assert H % num_heads == 0
    head_dim = H // num_heads

    if batch_tile is None:
        # Target >=128 rows per grid step (MXU-friendly LHS tiles) while keeping the tile a
        # divisor of B so the grid exactly covers the batch.
        batch_tile = max(1, min(B, (128 + S - 1) // S))
        while B % batch_tile:
            batch_tile -= 1
    assert B % batch_tile == 0

    # Host-side layout plumbing (free): pre-transpose weights to (in, out) so the kernel
    # never transposes a weight tile; biases as (1, H) rows for clean broadcasting.
    wq_t, wk_t = params["wq"].T, params["wk"].T
    wv_t, wf_t = params["wv"].T, params["wf"].T
    bq, bk = params["bq"].reshape(1, H), params["bk"].reshape(1, H)
    bv, bf = params["bv"].reshape(1, H), params["bf"].reshape(1, H)

    kernel = functools.partial(
        _mha_kernel, num_heads=num_heads, head_dim=head_dim, seq_len=S,
        batch_tile=batch_tile, compute_dtype=compute_dtype)

    # Grid-invariant operands: constant index_map keeps them resident in VMEM across steps.
    w_spec = pl.BlockSpec((H, H), lambda i: (0, 0))
    b_spec = pl.BlockSpec((1, H), lambda i: (0, 0))

    return pl.pallas_call(
        kernel,
        out_shape=jax.ShapeDtypeStruct((B, S, H), x.dtype),
        grid_spec=pltpu.PrefetchScalarGridSpec(
            num_scalar_prefetch=0,
            grid=(B // batch_tile,),
            in_specs=[
                pl.BlockSpec((batch_tile, S, H), lambda i: (i, 0, 0)),   # x tile
                w_spec, w_spec, w_spec, w_spec,                          # Wq^T, Wk^T, Wv^T, Wfc^T
                b_spec, b_spec, b_spec, b_spec,                          # bq, bk, bv, bfc
            ],
            out_specs=pl.BlockSpec((batch_tile, S, H), lambda i: (i, 0, 0)),
        ),
        compiler_params=pltpu.CompilerParams(
            dimension_semantics=("parallel",),
        ),
    )(x, wq_t, wk_t, wv_t, wf_t, bq, bk, bv, bf)


def mha_reference(x, params, *, num_heads: int):
    """Pure-JAX reference matching the PyTorch forward exactly."""
    B, S, H = x.shape
    hd = H // num_heads
    lin = lambda a, w, b: jnp.einsum("bsh,oh->bso", a, w) + b
    q = lin(x, params["wq"], params["bq"])
    k = lin(x, params["wk"], params["bk"])
    v = lin(x, params["wv"], params["bv"])
    # split dim=-1 into heads, cat dim=0 -> (num_heads*B, S, hd), head-major
    split_cat = lambda t: jnp.concatenate(
        [t[..., h * hd:(h + 1) * hd] for h in range(num_heads)], axis=0)
    q, k, v = split_cat(q), split_cat(k), split_cat(v)
    scores = jnp.matmul(q, jnp.swapaxes(k, -2, -1)) / math.sqrt(hd)
    weights = jax.nn.softmax(scores, axis=-1)
    attn = jnp.matmul(weights, v)
    attn = jnp.concatenate([attn[h * B:(h + 1) * B] for h in range(num_heads)], axis=-1)
    return jnp.einsum("bsh,oh->bso", attn, params["wf"]) + params["bf"]


def make_params(key, hidden_size):
    """Deterministic synthetic params with PyTorch nn.Linear shapes: W (out, in), b (out,)."""
    keys = jax.random.split(key, 8)
    bound = 1.0 / math.sqrt(hidden_size)
    u = lambda k, shape: jax.random.uniform(k, shape, jnp.float32, -bound, bound)
    return {
        "wq": u(keys[0], (hidden_size, hidden_size)), "bq": u(keys[1], (hidden_size,)),
        "wk": u(keys[2], (hidden_size, hidden_size)), "bk": u(keys[3], (hidden_size,)),
        "wv": u(keys[4], (hidden_size, hidden_size)), "bv": u(keys[5], (hidden_size,)),
        "wf": u(keys[6], (hidden_size, hidden_size)), "bf": u(keys[7], (hidden_size,)),
    }


if __name__ == "__main__":
    B, S, H = 2, 8, 32
    num_heads = 4

    key = jax.random.PRNGKey(0)
    kx, kp = jax.random.split(key)
    x = jax.random.normal(kx, (B, S, H), dtype=jnp.float32)
    params = make_params(kp, H)

    out = mha_pallas(x, params, num_heads=num_heads)
    out = jax.block_until_ready(out)

    ref = mha_reference(x, params, num_heads=num_heads)
    assert out.shape == (B, S, H)
    assert jnp.allclose(out, ref, atol=1e-4, rtol=1e-4), "Pallas output mismatch vs reference"

    print("KERNEL_OK")
</pallas_src>

<mosaic_0001>
module attributes {stable_mosaic.version = 11 : i64} {
  func.func @_mha_kernel(%arg0: i32, %arg1: memref<2x8x32xf32, #tpu.memory_space<vmem>>, %arg2: memref<32x32xf32, #tpu.memory_space<vmem>>, %arg3: memref<32x32xf32, #tpu.memory_space<vmem>>, %arg4: memref<32x32xf32, #tpu.memory_space<vmem>>, %arg5: memref<32x32xf32, #tpu.memory_space<vmem>>, %arg6: memref<1x32xf32, #tpu.memory_space<vmem>>, %arg7: memref<1x32xf32, #tpu.memory_space<vmem>>, %arg8: memref<1x32xf32, #tpu.memory_space<vmem>>, %arg9: memref<1x32xf32, #tpu.memory_space<vmem>>, %arg10: memref<2x8x32xf32, #tpu.memory_space<vmem>>) attributes {dimension_semantics = [#tpu.dimension_semantics<parallel>], iteration_bounds = array<i64: 1>, scalar_prefetch = 0 : i64, scratch_operands = 0 : i64, tpu.core_type = #tpu.core_type<tc>, window_params = [{transform_indices = @transform_0, window_bounds = array<i64: 2, 8, 32>}, {pipeline_mode = #tpu.pipeline_mode<synchronous>, transform_indices = @transform_1, window_bounds = array<i64: 32, 32>}, {pipeline_mode = #tpu.pipeline_mode<synchronous>, transform_indices = @transform_2, window_bounds = array<i64: 32, 32>}, {pipeline_mode = #tpu.pipeline_mode<synchronous>, transform_indices = @transform_3, window_bounds = array<i64: 32, 32>}, {pipeline_mode = #tpu.pipeline_mode<synchronous>, transform_indices = @transform_4, window_bounds = array<i64: 32, 32>}, {pipeline_mode = #tpu.pipeline_mode<synchronous>, transform_indices = @transform_5, window_bounds = array<i64: 1, 32>}, {pipeline_mode = #tpu.pipeline_mode<synchronous>, transform_indices = @transform_6, window_bounds = array<i64: 1, 32>}, {pipeline_mode = #tpu.pipeline_mode<synchronous>, transform_indices = @transform_7, window_bounds = array<i64: 1, 32>}, {pipeline_mode = #tpu.pipeline_mode<synchronous>, transform_indices = @transform_8, window_bounds = array<i64: 1, 32>}, {transform_indices = @transform_9, window_bounds = array<i64: 2, 8, 32>}]} {
    %c0 = arith.constant 0 : index
    %c0_0 = arith.constant 0 : index
    %c0_1 = arith.constant 0 : index
    %0 = vector.load %arg1[%c0, %c0_0, %c0_1] : memref<2x8x32xf32, #tpu.memory_space<vmem>>, vector<2x8x32xf32>
    %1 = vector.shape_cast %0 : vector<2x8x32xf32> to vector<16x32xf32>
    %c0_2 = arith.constant 0 : index
    %c0_3 = arith.constant 0 : index
    %2 = vector.load %arg2[%c0_2, %c0_3] : memref<32x32xf32, #tpu.memory_space<vmem>>, vector<32x32xf32>
    %cst = arith.constant dense<0.000000e+00> : vector<16x32xf32>
    %3 = tpu.matmul %1, %2, %cst {dimension_numbers = #tpu.dot_dimension_numbers<[1], [0], [0], [1], [0, 0, 1, 1], [], []>} : vector<16x32xf32>, vector<32x32xf32>, vector<16x32xf32> -> vector<16x32xf32>
    %c0_4 = arith.constant 0 : index
    %c0_5 = arith.constant 0 : index
    %4 = vector.load %arg6[%c0_4, %c0_5] : memref<1x32xf32, #tpu.memory_space<vmem>>, vector<1x32xf32>
    %5 = vector.broadcast %4 : vector<1x32xf32> to vector<16x32xf32>
    %6 = arith.addf %3, %5 : vector<16x32xf32>
    %c0_6 = arith.constant 0 : index
    %c0_7 = arith.constant 0 : index
    %7 = vector.load %arg3[%c0_6, %c0_7] : memref<32x32xf32, #tpu.memory_space<vmem>>, vector<32x32xf32>
    %cst_8 = arith.constant dense<0.000000e+00> : vector<16x32xf32>
    %8 = tpu.matmul %1, %7, %cst_8 {dimension_numbers = #tpu.dot_dimension_numbers<[1], [0], [0], [1], [0, 0, 1, 1], [], []>} : vector<16x32xf32>, vector<32x32xf32>, vector<16x32xf32> -> vector<16x32xf32>
    %c0_9 = arith.constant 0 : index
    %c0_10 = arith.constant 0 : index
    %9 = vector.load %arg7[%c0_9, %c0_10] : memref<1x32xf32, #tpu.memory_space<vmem>>, vector<1x32xf32>
    %10 = vector.broadcast %9 : vector<1x32xf32> to vector<16x32xf32>
    %11 = arith.addf %8, %10 : vector<16x32xf32>
    %c0_11 = arith.constant 0 : index
    %c0_12 = arith.constant 0 : index
    %12 = vector.load %arg4[%c0_11, %c0_12] : memref<32x32xf32, #tpu.memory_space<vmem>>, vector<32x32xf32>
    %cst_13 = arith.constant dense<0.000000e+00> : vector<16x32xf32>
    %13 = tpu.matmul %1, %12, %cst_13 {dimension_numbers = #tpu.dot_dimension_numbers<[1], [0], [0], [1], [0, 0, 1, 1], [], []>} : vector<16x32xf32>, vector<32x32xf32>, vector<16x32xf32> -> vector<16x32xf32>
    %c0_14 = arith.constant 0 : index
    %c0_15 = arith.constant 0 : index
    %14 = vector.load %arg8[%c0_14, %c0_15] : memref<1x32xf32, #tpu.memory_space<vmem>>, vector<1x32xf32>
    %15 = vector.broadcast %14 : vector<1x32xf32> to vector<16x32xf32>
    %16 = arith.addf %13, %15 : vector<16x32xf32>
    %cst_16 = arith.constant 0.353553385 : f32
    %17 = vector.broadcast %cst_16 : f32 to vector<16x32xf32>
    %18 = arith.mulf %6, %17 : vector<16x32xf32>
    %19 = vector.extract_strided_slice %18 {offsets = [0, 0], sizes = [8, 32], strides = [1, 1]} : vector<16x32xf32> to vector<8x32xf32>
    %20 = vector.shape_cast %19 : vector<8x32xf32> to vector<8x4x8xf32>
    %21 = tpu.transpose %20, [1, 0, 2] : vector<8x4x8xf32> -> vector<4x8x8xf32>
    %22 = vector.extract_strided_slice %11 {offsets = [0, 0], sizes = [8, 32], strides = [1, 1]} : vector<16x32xf32> to vector<8x32xf32>
    %23 = vector.shape_cast %22 : vector<8x32xf32> to vector<8x4x8xf32>
    %24 = tpu.transpose %23, [1, 0, 2] : vector<8x4x8xf32> -> vector<4x8x8xf32>
    %25 = vector.extract_strided_slice %16 {offsets = [0, 0], sizes = [8, 32], strides = [1, 1]} : vector<16x32xf32> to vector<8x32xf32>
    %26 = vector.shape_cast %25 : vector<8x32xf32> to vector<8x4x8xf32>
    %27 = tpu.transpose %26, [1, 0, 2] : vector<8x4x8xf32> -> vector<4x8x8xf32>
    "tpu.trace_start"() <{level = 10 : i32, message = "hqd,hkd->hqk"}> : () -> ()
    %cst_17 = arith.constant dense<0.000000e+00> : vector<4x8x8xf32>
    %28 = tpu.matmul %21, %24, %cst_17 {dimension_numbers = #tpu.dot_dimension_numbers<[2], [2], [1], [1], [0, 0, 0, 1, 1, 1], [0], [0]>} : vector<4x8x8xf32>, vector<4x8x8xf32>, vector<4x8x8xf32> -> vector<4x8x8xf32>
    "tpu.trace_stop"() : () -> ()
    %cst_18 = arith.constant dense<0xFF800000> : vector<4x8xf32>
    %29 = vector.multi_reduction <maximumf>, %28, %cst_18 [2] : vector<4x8x8xf32> to vector<4x8xf32>
    %30 = vector.shape_cast %29 : vector<4x8xf32> to vector<4x8x1xf32>
    %31 = vector.broadcast %30 : vector<4x8x1xf32> to vector<4x8x8xf32>
    %32 = arith.subf %28, %31 : vector<4x8x8xf32>
    %33 = math.exp %32 : vector<4x8x8xf32>
    %cst_19 = arith.constant dense<0.000000e+00> : vector<4x8xf32>
    %34 = vector.multi_reduction <add>, %33, %cst_19 [2] : vector<4x8x8xf32> to vector<4x8xf32>
    %35 = vector.shape_cast %34 : vector<4x8xf32> to vector<4x8x1xf32>
    %36 = tpu.reciprocal %35 : vector<4x8x1xf32> -> vector<4x8x1xf32>
    %37 = vector.broadcast %36 : vector<4x8x1xf32> to vector<4x8x8xf32>
    %38 = arith.mulf %33, %37 : vector<4x8x8xf32>
    "tpu.trace_start"() <{level = 10 : i32, message = "hqk,hkd->hqd"}> : () -> ()
    %cst_20 = arith.constant dense<0.000000e+00> : vector<4x8x8xf32>
    %39 = tpu.matmul %38, %27, %cst_20 {dimension_numbers = #tpu.dot_dimension_numbers<[2], [1], [1], [2], [0, 0, 0, 1, 1, 2], [0], [0]>} : vector<4x8x8xf32>, vector<4x8x8xf32>, vector<4x8x8xf32> -> vector<4x8x8xf32>
    "tpu.trace_stop"() : () -> ()
    %40 = tpu.transpose %39, [1, 0, 2] : vector<4x8x8xf32> -> vector<8x4x8xf32>
    %41 = vector.shape_cast %40 : vector<8x4x8xf32> to vector<8x32xf32>
    %42 = vector.extract_strided_slice %18 {offsets = [8, 0], sizes = [8, 32], strides = [1, 1]} : vector<16x32xf32> to vector<8x32xf32>
    %43 = vector.shape_cast %42 : vector<8x32xf32> to vector<8x4x8xf32>
    %44 = tpu.transpose %43, [1, 0, 2] : vector<8x4x8xf32> -> vector<4x8x8xf32>
    %45 = vector.extract_strided_slice %11 {offsets = [8, 0], sizes = [8, 32], strides = [1, 1]} : vector<16x32xf32> to vector<8x32xf32>
    %46 = vector.shape_cast %45 : vector<8x32xf32> to vector<8x4x8xf32>
    %47 = tpu.transpose %46, [1, 0, 2] : vector<8x4x8xf32> -> vector<4x8x8xf32>
    %48 = vector.extract_strided_slice %16 {offsets = [8, 0], sizes = [8, 32], strides = [1, 1]} : vector<16x32xf32> to vector<8x32xf32>
    %49 = vector.shape_cast %48 : vector<8x32xf32> to vector<8x4x8xf32>
    %50 = tpu.transpose %49, [1, 0, 2] : vector<8x4x8xf32> -> vector<4x8x8xf32>
    "tpu.trace_start"() <{level = 10 : i32, message = "hqd,hkd->hqk"}> : () -> ()
    %cst_21 = arith.constant dense<0.000000e+00> : vector<4x8x8xf32>
    %51 = tpu.matmul %44, %47, %cst_21 {dimension_numbers = #tpu.dot_dimension_numbers<[2], [2], [1], [1], [0, 0, 0, 1, 1, 1], [0], [0]>} : vector<4x8x8xf32>, vector<4x8x8xf32>, vector<4x8x8xf32> -> vector<4x8x8xf32>
    "tpu.trace_stop"() : () -> ()
    %cst_22 = arith.constant dense<0xFF800000> : vector<4x8xf32>
    %52 = vector.multi_reduction <maximumf>, %51, %cst_22 [2] : vector<4x8x8xf32> to vector<4x8xf32>
    %53 = vector.shape_cast %52 : vector<4x8xf32> to vector<4x8x1xf32>
    %54 = vector.broadcast %53 : vector<4x8x1xf32> to vector<4x8x8xf32>
    %55 = arith.subf %51, %54 : vector<4x8x8xf32>
    %56 = math.exp %55 : vector<4x8x8xf32>
    %cst_23 = arith.constant dense<0.000000e+00> : vector<4x8xf32>
    %57 = vector.multi_reduction <add>, %56, %cst_23 [2] : vector<4x8x8xf32> to vector<4x8xf32>
    %58 = vector.shape_cast %57 : vector<4x8xf32> to vector<4x8x1xf32>
    %59 = tpu.reciprocal %58 : vector<4x8x1xf32> -> vector<4x8x1xf32>
    %60 = vector.broadcast %59 : vector<4x8x1xf32> to vector<4x8x8xf32>
    %61 = arith.mulf %56, %60 : vector<4x8x8xf32>
    "tpu.trace_start"() <{level = 10 : i32, message = "hqk,hkd->hqd"}> : () -> ()
    %cst_24 = arith.constant dense<0.000000e+00> : vector<4x8x8xf32>
    %62 = tpu.matmul %61, %50, %cst_24 {dimension_numbers = #tpu.dot_dimension_numbers<[2], [1], [1], [2], [0, 0, 0, 1, 1, 2], [0], [0]>} : vector<4x8x8xf32>, vector<4x8x8xf32>, vector<4x8x8xf32> -> vector<4x8x8xf32>
    "tpu.trace_stop"() : () -> ()
    %63 = tpu.transpose %62, [1, 0, 2] : vector<4x8x8xf32> -> vector<8x4x8xf32>
    %64 = vector.shape_cast %63 : vector<8x4x8xf32> to vector<8x32xf32>
    %65 = tpu.concatenate %41, %64 in 0 : vector<8x32xf32>, vector<8x32xf32> -> vector<16x32xf32>
    %c0_25 = arith.constant 0 : index
    %c0_26 = arith.constant 0 : index
    %66 = vector.load %arg5[%c0_25, %c0_26] : memref<32x32xf32, #tpu.memory_space<vmem>>, vector<32x32xf32>
    %cst_27 = arith.constant dense<0.000000e+00> : vector<16x32xf32>
    %67 = tpu.matmul %65, %66, %cst_27 {dimension_numbers = #tpu.dot_dimension_numbers<[1], [0], [0], [1], [0, 0, 1, 1], [], []>} : vector<16x32xf32>, vector<32x32xf32>, vector<16x32xf32> -> vector<16x32xf32>
    %c0_28 = arith.constant 0 : index
    %c0_29 = arith.constant 0 : index
    %68 = vector.load %arg9[%c0_28, %c0_29] : memref<1x32xf32, #tpu.memory_space<vmem>>, vector<1x32xf32>
    %69 = vector.broadcast %68 : vector<1x32xf32> to vector<16x32xf32>
    %70 = arith.addf %67, %69 : vector<16x32xf32>
    %71 = vector.shape_cast %70 : vector<16x32xf32> to vector<2x8x32xf32>
    %c0_30 = arith.constant 0 : index
    %c0_31 = arith.constant 0 : index
    %c0_32 = arith.constant 0 : index
    %72 = vector.load %arg10[%c0_30, %c0_31, %c0_32] : memref<2x8x32xf32, #tpu.memory_space<vmem>>, vector<2x8x32xf32>
    tpu.vector_store %arg10[%c0_30, %c0_31, %c0_32], %71 {strides = array<i32>} : memref<2x8x32xf32, #tpu.memory_space<vmem>>, vector<2x8x32xf32>,
    return
  }
  func.func @transform_0(%arg0: i32) -> (i32, i32, i32) {
    %c0_i32 = arith.constant 0 : i32
    %c0_i32_0 = arith.constant 0 : i32
    %c0_i32_1 = arith.constant 0 : i32
    return %arg0, %c0_i32, %c0_i32_0 : i32, i32, i32
  }
  func.func @transform_1(%arg0: i32) -> (i32, i32) {
    %c0_i32 = arith.constant 0 : i32
    %c0_i32_0 = arith.constant 0 : i32
    %c0_i32_1 = arith.constant 0 : i32
    return %c0_i32, %c0_i32_0 : i32, i32
  }
  func.func @transform_2(%arg0: i32) -> (i32, i32) {
    %c0_i32 = arith.constant 0 : i32
    %c0_i32_0 = arith.constant 0 : i32
    %c0_i32_1 = arith.constant 0 : i32
    return %c0_i32, %c0_i32_0 : i32, i32
  }
  func.func @transform_3(%arg0: i32) -> (i32, i32) {
    %c0_i32 = arith.constant 0 : i32
    %c0_i32_0 = arith.constant 0 : i32
    %c0_i32_1 = arith.constant 0 : i32
    return %c0_i32, %c0_i32_0 : i32, i32
  }
  func.func @transform_4(%arg0: i32) -> (i32, i32) {
    %c0_i32 = arith.constant 0 : i32
    %c0_i32_0 = arith.constant 0 : i32
    %c0_i32_1 = arith.constant 0 : i32
    return %c0_i32, %c0_i32_0 : i32, i32
  }
  func.func @transform_5(%arg0: i32) -> (i32, i32) {
    %c0_i32 = arith.constant 0 : i32
    %c0_i32_0 = arith.constant 0 : i32
    %c0_i32_1 = arith.constant 0 : i32
    return %c0_i32, %c0_i32_0 : i32, i32
  }
  func.func @transform_6(%arg0: i32) -> (i32, i32) {
    %c0_i32 = arith.constant 0 : i32
    %c0_i32_0 = arith.constant 0 : i32
    %c0_i32_1 = arith.constant 0 : i32
    return %c0_i32, %c0_i32_0 : i32, i32
  }
  func.func @transform_7(%arg0: i32) -> (i32, i32) {
    %c0_i32 = arith.constant 0 : i32
    %c0_i32_0 = arith.constant 0 : i32
    %c0_i32_1 = arith.constant 0 : i32
    return %c0_i32, %c0_i32_0 : i32, i32
  }
  func.func @transform_8(%arg0: i32) -> (i32, i32) {
    %c0_i32 = arith.constant 0 : i32
    %c0_i32_0 = arith.constant 0 : i32
    %c0_i32_1 = arith.constant 0 : i32
    return %c0_i32, %c0_i32_0 : i32, i32
  }
  func.func @transform_9(%arg0: i32) -> (i32, i32, i32) {
    %c0_i32 = arith.constant 0 : i32
    %c0_i32_0 = arith.constant 0 : i32
    %c0_i32_1 = arith.constant 0 : i32
    return %arg0, %c0_i32, %c0_i32_0 : i32, i32, i32
  }
}

</mosaic_0001>

<llo_original>
// kernel: tpu_custom_call.1
$region0: #{tpu_custom_call.1}
  #allocation0 [shape = 'u32[]', space=smem, size = 0x4, offset = 0x4, fixed_abs, tag = 'smem constant byte address 0x4 - core index']
  #allocation1 [shape = 'u32[144,128]{1,0:T(1,128)}', space=vmem, size = 0x12000, scoped, tag = 'internal scratch']
  %s0 = inlined_call_operand.hbm [shape: f32[2,8,32], index: 0, kind: input, shape index: {}]
  %s1 = inlined_call_operand.hbm [shape: f32[32,32], index: 1, kind: input, shape index: {}]
  %s2 = inlined_call_operand.hbm [shape: f32[32,32], index: 2, kind: input, shape index: {}]
  %s3 = inlined_call_operand.hbm [shape: f32[32,32], index: 3, kind: input, shape index: {}]
  %s4 = inlined_call_operand.hbm [shape: f32[32,32], index: 4, kind: input, shape index: {}]
  %s5 = inlined_call_operand.vmem [shape: f32[1,32], index: 5, kind: input, shape index: {}]
  %s6 = inlined_call_operand.vmem [shape: f32[1,32], index: 6, kind: input, shape index: {}]
  %s7 = inlined_call_operand.vmem [shape: f32[1,32], index: 7, kind: input, shape index: {}]
  %s8 = inlined_call_operand.vmem [shape: f32[1,32], index: 8, kind: input, shape index: {}]
  %s9 = inlined_call_operand.hbm [shape: f32[2,8,32], index: 9, kind: output, shape index: {}]
  %s10 = sld [smem:[#allocation0]]
  $region66: #{tpu_custom_call.1} parent=0
    _
  %s12 = ssub.s32 1, %s10
  %s13 = scalar_select 0, %s12, %s10
  $region1: #{tpu_custom_call.1} parent=0
    #allocation2 [shape = 'u8[8192]{0}', space=vmem, size = 0x2000, scoped, tag = 'input window, operand 0, single buffered']
    #allocation3 [shape = 's32[1]{0}', space=sflag, size = 0x4, scoped, tag = 'scoped memory for tpu_custom_call.1']
    #allocation4 [shape = 's32[1]{0}', space=sflag, size = 0x4, scoped, tag = 'scoped memory for tpu_custom_call.1']
    #allocation5 [shape = 'u8[16384]{0}', space=vmem, size = 0x4000, scoped, tag = 'input window, operand 1, single buffered']
    #allocation6 [shape = 's32[1]{0}', space=sflag, size = 0x4, scoped, tag = 'scoped memory for tpu_custom_call.1']
    #allocation7 [shape = 'u8[16384]{0}', space=vmem, size = 0x4000, scoped, tag = 'input window, operand 2, single buffered']
    #allocation8 [shape = 'u8[16384]{0}', space=vmem, size = 0x4000, scoped, tag = 'input window, operand 3, single buffered']
    #allocation9 [shape = 's32[1]{0}', space=sflag, size = 0x4, scoped, tag = 'scoped memory for tpu_custom_call.1']
    #allocation10 [shape = 'u8[16384]{0}', space=vmem, size = 0x4000, scoped, tag = 'input window, operand 4, single buffered']
    #allocation11 [shape = 'u8[8192]{0}', space=vmem, size = 0x2000, scoped, tag = 'output window, operand 0, single buffered']
    %14 = vsyncpa [#allocation3], 0
    %15 = vsyncpa [#allocation6], 0
    %16 = vsyncpa [#allocation9], 0
    %17 = vsyncpa [#allocation4], 0
    // Predicated region
    $region2: #{tpu_custom_call.1} parent=1 // pred_check
      _
    $region3: #{tpu_custom_call.1} parent=1 // pred_check_branch
      %19 = sbr.rel (0) target = $region5
    $region4: #{tpu_custom_call.1} parent=1 // pred_region
      %s21 = ssub.s32 256, 256
      %22 = vsyncadd [#allocation3], %s21
      %s23 = sshll.u32 [#allocation2], 4
      %s24 = int_to_ptr.vmem [resolvable:$true] %s23
      %29 = dma.hbm_to_vmem [thread:$0]  %s0, 256, %s24, [#allocation3], 128, 128, 8
    $region5: #{tpu_custom_call.1} parent=1 // pred_fallthru
      _
    // Predicated region
    $region6: #{tpu_custom_call.1} parent=1 // pred_check
      _
    $region7: #{tpu_custom_call.1} parent=1 // pred_check_branch
      %31 = sbr.rel (0) target = $region9
    $region8: #{tpu_custom_call.1} parent=1 // pred_region
      %s33 = ssub.s32 512, 512
      %34 = vsyncadd [#allocation6], %s33
      %s35 = sshll.u32 [#allocation5], 4
      %s36 = int_to_ptr.vmem [resolvable:$true] %s35
      %41 = dma.hbm_to_vmem [thread:$0]  %s1, 512, %s36, [#allocation6], 128, 128, 8
    $region9: #{tpu_custom_call.1} parent=1 // pred_fallthru
      _
    // Predicated region
    $region10: #{tpu_custom_call.1} parent=1 // pred_check
      _
    $region11: #{tpu_custom_call.1} parent=1 // pred_check_branch
      %43 = sbr.rel (0) target = $region13
    $region12: #{tpu_custom_call.1} parent=1 // pred_region
      %s45 = ssub.s32 512, 512
      %46 = vsyncadd [#allocation6], %s45
      %s47 = sshll.u32 [#allocation7], 4
      %s48 = int_to_ptr.vmem [resolvable:$true] %s47
      %53 = dma.hbm_to_vmem [thread:$0]  %s2, 512, %s48, [#allocation6], 128, 128, 8
    $region13: #{tpu_custom_call.1} parent=1 // pred_fallthru
      _
    // Predicated region
    $region14: #{tpu_custom_call.1} parent=1 // pred_check
      _
    $region15: #{tpu_custom_call.1} parent=1 // pred_check_branch
      %55 = sbr.rel (0) target = $region17
    $region16: #{tpu_custom_call.1} parent=1 // pred_region
      %s57 = ssub.s32 512, 512
      %58 = vsyncadd [#allocation9], %s57
      %s59 = sshll.u32 [#allocation8], 4
      %s60 = int_to_ptr.vmem [resolvable:$true] %s59
      %65 = dma.hbm_to_vmem [thread:$0]  %s3, 512, %s60, [#allocation9], 128, 128, 8
    $region17: #{tpu_custom_call.1} parent=1 // pred_fallthru
      _
    // Predicated region
    $region18: #{tpu_custom_call.1} parent=1 // pred_check
      _
    $region19: #{tpu_custom_call.1} parent=1 // pred_check_branch
      %67 = sbr.rel (0) target = $region21
    $region20: #{tpu_custom_call.1} parent=1 // pred_region
      %s69 = ssub.s32 512, 512
      %70 = vsyncadd [#allocation9], %s69
      %s71 = sshll.u32 [#allocation10], 4
      %s72 = int_to_ptr.vmem [resolvable:$true] %s71
      %77 = dma.hbm_to_vmem [thread:$0]  %s4, 512, %s72, [#allocation9], 128, 128, 8
    $region21: #{tpu_custom_call.1} parent=1 // pred_fallthru
      _
    // Predicated region
    $region22: #{tpu_custom_call.1} parent=1 // pred_check
      _
    $region23: #{tpu_custom_call.1} parent=1 // pred_check_branch
      %79 = sbr.rel (0) target = $region25
    $region24: #{tpu_custom_call.1} parent=1 // pred_region
      _
    $region25: #{tpu_custom_call.1} parent=1 // pred_fallthru
      _
    // Predicated region
    $region26: #{tpu_custom_call.1} parent=1 // pred_check
      _
    $region27: #{tpu_custom_call.1} parent=1 // pred_check_branch
      %81 = sbr.rel (0) target = $region29
    $region28: #{tpu_custom_call.1} parent=1 // pred_region
      _
    $region29: #{tpu_custom_call.1} parent=1 // pred_fallthru
      _
    // Predicated region
    $region30: #{tpu_custom_call.1} parent=1 // pred_check
      _
    $region31: #{tpu_custom_call.1} parent=1 // pred_check_branch
      %83 = sbr.rel (0) target = $region33
    $region32: #{tpu_custom_call.1} parent=1 // pred_region
      _
    $region33: #{tpu_custom_call.1} parent=1 // pred_fallthru
      _
    // Predicated region
    $region34: #{tpu_custom_call.1} parent=1 // pred_check
      _
    $region35: #{tpu_custom_call.1} parent=1 // pred_check_branch
      %85 = sbr.rel (0) target = $region37
    $region36: #{tpu_custom_call.1} parent=1 // pred_region
      _
    $region37: #{tpu_custom_call.1} parent=1 // pred_fallthru
      _
    // Predicated region
    $region38: #{tpu_custom_call.1} parent=1 // pred_check
      _
    $region39: #{tpu_custom_call.1} parent=1 // pred_check_branch
      %87 = sbr.rel (0) target = $region41
    $region40: #{tpu_custom_call.1} parent=1 // pred_region
      %88 = dma.done [#allocation3], 256
    $region41: #{tpu_custom_call.1} parent=1 // pred_fallthru
      _
    // Predicated region
    $region42: #{tpu_custom_call.1} parent=1 // pred_check
      _
    $region43: #{tpu_custom_call.1} parent=1 // pred_check_branch
      %90 = sbr.rel (0) target = $region45
    $region44: #{tpu_custom_call.1} parent=1 // pred_region
      %91 = dma.done [#allocation6], 512
    $region45: #{tpu_custom_call.1} parent=1 // pred_fallthru
      _
    // Predicated region
    $region46: #{tpu_custom_call.1} parent=1 // pred_check
      _
    $region47: #{tpu_custom_call.1} parent=1 // pred_check_branch
      %93 = sbr.rel (0) target = $region49
    $region48: #{tpu_custom_call.1} parent=1 // pred_region
      %94 = dma.done [#allocation6], 512
    $region49: #{tpu_custom_call.1} parent=1 // pred_fallthru
      _
    // Predicated region
    $region50: #{tpu_custom_call.1} parent=1 // pred_check
      _
    $region51: #{tpu_custom_call.1} parent=1 // pred_check_branch
      %96 = sbr.rel (0) target = $region53
    $region52: #{tpu_custom_call.1} parent=1 // pred_region
      %97 = dma.done [#allocation9], 512
    $region53: #{tpu_custom_call.1} parent=1 // pred_fallthru
      _
    // Predicated region
    $region54: #{tpu_custom_call.1} parent=1 // pred_check
      _
    $region55: #{tpu_custom_call.1} parent=1 // pred_check_branch
      %99 = sbr.rel (0) target = $region57
    $region56: #{tpu_custom_call.1} parent=1 // pred_region
      %100 = dma.done [#allocation9], 512
    $region57: #{tpu_custom_call.1} parent=1 // pred_fallthru
      _
    %v101 = vld [vmem:[#allocation2] sm:$0xff]
    %v102 = vld [vmem:[#allocation2 + $0x8] sm:$0xff]
    %v103 = vld [vmem:[#allocation5] sm:$0xff]
    %v104 = vld [vmem:[#allocation5 + $0x8] sm:$0xff]
    %v105 = vld [vmem:[#allocation5 + $0x10] sm:$0xff]
    %v106 = vld [vmem:[#allocation5 + $0x18] sm:$0xff]
    %v107 = vld [vmem:[%s5] sm:$0x1]
    %v109 = vlaneseq
    %v110 = vshrl.u32 %v109, 7
    %v111 = vsub.s32 0, %v110
    %v112 = vrot.slane %v107, %v111
    %vm114 = vcmask 261120
    %v116 = vsel %vm114, %v101, 0
    %v119 = vsel %vm114, %v102, 0
    %121 = vmatprep.subr.mxu0 0.0
    %122 = vmatpush1.msra.mxu0 %v103
    %123 = vmatprep.subr.mxu0 0.0
    %124 = vmatpush1.msra.mxu0 %v104
    %125 = vmatprep.subr.mxu0 0.0
    %126 = vmatpush1.msra.mxu0 %v105
    %127 = vmatprep.subr.mxu0 0.0
    %128 = vmatpush1.msra.mxu0 %v106
    %129 = vmatprep.subr.mxu0 0.0
    %130 = vmatpush1.msra.mxu0 0.0
    %131 = vmatprep.subr.mxu0 0.0
    %132 = vmatpush1.msra.mxu0 0.0
    %133 = vmatprep.subr.mxu0 0.0
    %134 = vmatpush1.msra.mxu0 0.0
    %135 = vmatprep.subr.mxu0 0.0
    %136 = vmatpush1.msra.mxu0 0.0
    %137 = vmatprep.subr.mxu0 0.0
    %138 = vmatpush1.msra.mxu0 0.0
    %139 = vmatprep.subr.mxu0 0.0
    %140 = vmatpush1.msra.mxu0 0.0
    %141 = vmatprep.subr.mxu0 0.0
    %142 = vmatpush1.msra.mxu0 0.0
    %143 = vmatprep.subr.mxu0 0.0
    %144 = vmatpush1.msra.mxu0 0.0
    %145 = vmatprep.subr.mxu0 0.0
    %146 = vmatpush1.msra.mxu0 0.0
    %147 = vmatprep.subr.mxu0 0.0
    %148 = vmatpush1.msra.mxu0 0.0
    %149 = vmatprep.subr.mxu0 0.0
    %150 = vmatpush1.msra.mxu0 0.0
    %151 = vmatprep.subr.mxu0 0.0
    %152 = vmatpush1.msra.mxu0 0.0
    %153 = vmatprep.subr.mxu0 0.0
    %154 = vmatpush1.msra.mxu0 0.0
    %155 = vmatprep.subr.mxu0 0.0
    %156 = vmatpush1.msra.mxu0 0.0
    %157 = vmatprep.subr.mxu0 0.0
    %158 = vmatpush1.msra.mxu0 0.0
    %159 = vmatprep.subr.mxu0 0.0
    %160 = vmatpush1.msra.mxu0 0.0
    %161 = vmatprep.subr.mxu0 0.0
    %162 = vmatpush1.msra.mxu0 0.0
    %163 = vmatprep.subr.mxu0 0.0
    %164 = vmatpush1.msra.mxu0 0.0
    %165 = vmatprep.subr.mxu0 0.0
    %166 = vmatpush1.msra.mxu0 0.0
    %167 = vmatprep.subr.mxu0 0.0
    %168 = vmatpush1.msra.mxu0 0.0
    %169 = vmatprep.subr.mxu0 0.0
    %170 = vmatpush1.msra.mxu0 0.0
    %171 = vmatprep.subr.mxu0 0.0
    %172 = vmatpush1.msra.mxu0 0.0
    %173 = vmatprep.subr.mxu0 0.0
    %174 = vmatpush1.msra.mxu0 0.0
    %175 = vmatprep.subr.mxu0 0.0
    %176 = vmatpush1.msra.mxu0 0.0
    %177 = vmatprep.subr.mxu0 0.0
    %178 = vmatpush1.msra.mxu0 0.0
    %179 = vmatprep.subr.mxu0 0.0
    %180 = vmatpush1.msra.mxu0 0.0
    %181 = vmatprep.subr.mxu0 0.0
    %182 = vmatpush1.msra.mxu0 0.0
    %183 = vmatprep.subr.mxu0 0.0
    %184 = vmatpush1.msra.mxu0 0.0
    %185 = vmatprep.mubr.f32.mxu0 0.0
    %186 = vmatmul.mubr.f32.gmra.mrb[0].mxu0 %v116
    %v187 = vpop.f32.mrb[0].mxu0
    %v188 = vadd.f32 %v112, %v187
    %v189 = vpop.f32.mrb[0].mxu0
    %190 = vmatprep.mubr.f32.mxu0 0.0
    %191 = vmatmul.mubr.f32.gmra.mrb[0].mxu0 %v119
    %v192 = vpop.f32.mrb[0].mxu0
    %v193 = vadd.f32 %v112, %v192
    %v194 = vpop.f32.mrb[0].mxu0
    %195 = vdwg.mxu0
    %v196 = vld [vmem:[#allocation7] sm:$0xff]
    %v197 = vld [vmem:[#allocation7 + $0x8] sm:$0xff]
    %v198 = vld [vmem:[#allocation7 + $0x10] sm:$0xff]
    %v199 = vld [vmem:[#allocation7 + $0x18] sm:$0xff]
    %v200 = vld [vmem:[%s6] sm:$0x1]
    %v202 = vlaneseq
    %v203 = vshrl.u32 %v202, 7
    %v204 = vsub.s32 0, %v203
    %v205 = vrot.slane %v200, %v204
    %207 = vmatprep.subr.mxu0 0.0
    %208 = vmatpush1.msra.mxu0 %v196
    %209 = vmatprep.subr.mxu0 0.0
    %210 = vmatpush1.msra.mxu0 %v197
    %211 = vmatprep.subr.mxu0 0.0
    %212 = vmatpush1.msra.mxu0 %v198
    %213 = vmatprep.subr.mxu0 0.0
    %214 = vmatpush1.msra.mxu0 %v199
    %215 = vmatprep.subr.mxu0 0.0
    %216 = vmatpush1.msra.mxu0 0.0
    %217 = vmatprep.subr.mxu0 0.0
    %218 = vmatpush1.msra.mxu0 0.0
    %219 = vmatprep.subr.mxu0 0.0
    %220 = vmatpush1.msra.mxu0 0.0
    %221 = vmatprep.subr.mxu0 0.0
    %222 = vmatpush1.msra.mxu0 0.0
    %223 = vmatprep.subr.mxu0 0.0
    %224 = vmatpush1.msra.mxu0 0.0
    %225 = vmatprep.subr.mxu0 0.0
    %226 = vmatpush1.msra.mxu0 0.0
    %227 = vmatprep.subr.mxu0 0.0
    %228 = vmatpush1.msra.mxu0 0.0
    %229 = vmatprep.subr.mxu0 0.0
    %230 = vmatpush1.msra.mxu0 0.0
    %231 = vmatprep.subr.mxu0 0.0
    %232 = vmatpush1.msra.mxu0 0.0
    %233 = vmatprep.subr.mxu0 0.0
    %234 = vmatpush1.msra.mxu0 0.0
    %235 = vmatprep.subr.mxu0 0.0
    %236 = vmatpush1.msra.mxu0 0.0
    %237 = vmatprep.subr.mxu0 0.0
    %238 = vmatpush1.msra.mxu0 0.0
    %239 = vmatprep.subr.mxu0 0.0
    %240 = vmatpush1.msra.mxu0 0.0
    %241 = vmatprep.subr.mxu0 0.0
    %242 = vmatpush1.msra.mxu0 0.0
    %243 = vmatprep.subr.mxu0 0.0
    %244 = vmatpush1.msra.mxu0 0.0
    %245 = vmatprep.subr.mxu0 0.0
    %246 = vmatpush1.msra.mxu0 0.0
    %247 = vmatprep.subr.mxu0 0.0
    %248 = vmatpush1.msra.mxu0 0.0
    %249 = vmatprep.subr.mxu0 0.0
    %250 = vmatpush1.msra.mxu0 0.0
    %251 = vmatprep.subr.mxu0 0.0
    %252 = vmatpush1.msra.mxu0 0.0
    %253 = vmatprep.subr.mxu0 0.0
    %254 = vmatpush1.msra.mxu0 0.0
    %255 = vmatprep.subr.mxu0 0.0
    %256 = vmatpush1.msra.mxu0 0.0
    %257 = vmatprep.subr.mxu0 0.0
    %258 = vmatpush1.msra.mxu0 0.0
    %259 = vmatprep.subr.mxu0 0.0
    %260 = vmatpush1.msra.mxu0 0.0
    %261 = vmatprep.subr.mxu0 0.0
    %262 = vmatpush1.msra.mxu0 0.0
    %263 = vmatprep.subr.mxu0 0.0
    %264 = vmatpush1.msra.mxu0 0.0
    %265 = vmatprep.subr.mxu0 0.0
    %266 = vmatpush1.msra.mxu0 0.0
    %267 = vmatprep.subr.mxu0 0.0
    %268 = vmatpush1.msra.mxu0 0.0
    %269 = vmatprep.subr.mxu0 0.0
    %270 = vmatpush1.msra.mxu0 0.0
    %271 = vmatprep.mubr.f32.mxu0 0.0
    %272 = vmatmul.mubr.f32.gmra.mrb[0].mxu0 %v116
    %v273 = vpop.f32.mrb[0].mxu0
    %v274 = vadd.f32 %v205, %v273
    %v275 = vpop.f32.mrb[0].mxu0
    %276 = vmatprep.mubr.f32.mxu0 0.0
    %277 = vmatmul.mubr.f32.gmra.mrb[0].mxu0 %v119
    %v278 = vpop.f32.mrb[0].mxu0
    %v279 = vadd.f32 %v205, %v278
    %v280 = vpop.f32.mrb[0].mxu0
    %281 = vdwg.mxu0
    %v282 = vld [vmem:[#allocation8] sm:$0xff]
    %v283 = vld [vmem:[#allocation8 + $0x8] sm:$0xff]
    %v284 = vld [vmem:[#allocation8 + $0x10] sm:$0xff]
    %v285 = vld [vmem:[#allocation8 + $0x18] sm:$0xff]
    %v286 = vld [vmem:[%s7] sm:$0x1]
    %v288 = vlaneseq
    %v289 = vshrl.u32 %v288, 7
    %v290 = vsub.s32 0, %v289
    %v291 = vrot.slane %v286, %v290
    %293 = vmatprep.subr.mxu0 0.0
    %294 = vmatpush1.msra.mxu0 %v282
    %295 = vmatprep.subr.mxu0 0.0
    %296 = vmatpush1.msra.mxu0 %v283
    %297 = vmatprep.subr.mxu0 0.0
    %298 = vmatpush1.msra.mxu0 %v284
    %299 = vmatprep.subr.mxu0 0.0
    %300 = vmatpush1.msra.mxu0 %v285
    %301 = vmatprep.subr.mxu0 0.0
    %302 = vmatpush1.msra.mxu0 0.0
    %303 = vmatprep.subr.mxu0 0.0
    %304 = vmatpush1.msra.mxu0 0.0
    %305 = vmatprep.subr.mxu0 0.0
    %306 = vmatpush1.msra.mxu0 0.0
    %307 = vmatprep.subr.mxu0 0.0
    %308 = vmatpush1.msra.mxu0 0.0
    %309 = vmatprep.subr.mxu0 0.0
    %310 = vmatpush1.msra.mxu0 0.0
    %311 = vmatprep.subr.mxu0 0.0
    %312 = vmatpush1.msra.mxu0 0.0
    %313 = vmatprep.subr.mxu0 0.0
    %314 = vmatpush1.msra.mxu0 0.0
    %315 = vmatprep.subr.mxu0 0.0
    %316 = vmatpush1.msra.mxu0 0.0
    %317 = vmatprep.subr.mxu0 0.0
    %318 = vmatpush1.msra.mxu0 0.0
    %319 = vmatprep.subr.mxu0 0.0
    %320 = vmatpush1.msra.mxu0 0.0
    %321 = vmatprep.subr.mxu0 0.0
    %322 = vmatpush1.msra.mxu0 0.0
    %323 = vmatprep.subr.mxu0 0.0
    %324 = vmatpush1.msra.mxu0 0.0
    %325 = vmatprep.subr.mxu0 0.0
    %326 = vmatpush1.msra.mxu0 0.0
    %327 = vmatprep.subr.mxu0 0.0
    %328 = vmatpush1.msra.mxu0 0.0
    %329 = vmatprep.subr.mxu0 0.0
    %330 = vmatpush1.msra.mxu0 0.0
    %331 = vmatprep.subr.mxu0 0.0
    %332 = vmatpush1.msra.mxu0 0.0
    %333 = vmatprep.subr.mxu0 0.0
    %334 = vmatpush1.msra.mxu0 0.0
    %335 = vmatprep.subr.mxu0 0.0
    %336 = vmatpush1.msra.mxu0 0.0
    %337 = vmatprep.subr.mxu0 0.0
    %338 = vmatpush1.msra.mxu0 0.0
    %339 = vmatprep.subr.mxu0 0.0
    %340 = vmatpush1.msra.mxu0 0.0
    %341 = vmatprep.subr.mxu0 0.0
    %342 = vmatpush1.msra.mxu0 0.0
    %343 = vmatprep.subr.mxu0 0.0
    %344 = vmatpush1.msra.mxu0 0.0
    %345 = vmatprep.subr.mxu0 0.0
    %346 = vmatpush1.msra.mxu0 0.0
    %347 = vmatprep.subr.mxu0 0.0
    %348 = vmatpush1.msra.mxu0 0.0
    %349 = vmatprep.subr.mxu0 0.0
    %350 = vmatpush1.msra.mxu0 0.0
    %351 = vmatprep.subr.mxu0 0.0
    %352 = vmatpush1.msra.mxu0 0.0
    %353 = vmatprep.subr.mxu0 0.0
    %354 = vmatpush1.msra.mxu0 0.0
    %355 = vmatprep.subr.mxu0 0.0
    %356 = vmatpush1.msra.mxu0 0.0
    %357 = vmatprep.mubr.f32.mxu0 0.0
    %358 = vmatmul.mubr.f32.gmra.mrb[0].mxu0 %v116
    %v359 = vpop.f32.mrb[0].mxu0
    %v360 = vadd.f32 %v291, %v359
    %v361 = vpop.f32.mrb[0].mxu0
    %362 = vmatprep.mubr.f32.mxu0 0.0
    %363 = vmatmul.mubr.f32.gmra.mrb[0].mxu0 %v119
    %v364 = vpop.f32.mrb[0].mxu0
    %v365 = vadd.f32 %v291, %v364
    %v366 = vpop.f32.mrb[0].mxu0
    %367 = vdwg.mxu0
    %v368 = vmul.f32 %v188, 0.35355338
    %v369 = vmul.f32 %v193, 0.35355338
    %371 = vrot.lane.b32.xlu0 %v368, 120
    %v372 = vpop.permute.xlu0 %371
    %374 = vrot.lane.b32.xlu0 %v368, 112
    %v375 = vpop.permute.xlu0 %374
    %377 = vrot.lane.b32.xlu0 %v368, 104
    %v378 = vpop.permute.xlu0 %377
    %v380 = vcombine.low %v368, %v375
    %v381 = vcombine.high %v368, %v375
    %v383 = vunpack.c.l.s4 1983009808
    %v384 = vunpack.c.0.s8 %v383
    %v385 = vlaneseq
    %v386 = vshrl.u32 %v385, 7
    %v387 = vsub.s32 %v384, %v386
    %v388 = vrot.slane %v380, %v387
    %v390 = vunpack.c.l.s4 1983009808
    %v391 = vunpack.c.0.s8 %v390
    %v392 = vlaneseq
    %v393 = vshrl.u32 %v392, 7
    %v394 = vsub.s32 %v391, %v393
    %v395 = vrot.slane %v381, %v394
    %v396 = vcombine.low %v372, %v378
    %v397 = vcombine.high %v372, %v378
    %v399 = vunpack.c.l.s4 1983009808
    %v400 = vunpack.c.0.s8 %v399
    %v401 = vlaneseq
    %v402 = vshrl.u32 %v401, 7
    %v403 = vsub.s32 %v400, %v402
    %v404 = vrot.slane %v396, %v403
    %v406 = vunpack.c.l.s4 1983009808
    %v407 = vunpack.c.0.s8 %v406
    %v408 = vlaneseq
    %v409 = vshrl.u32 %v408, 7
    %v410 = vsub.s32 %v407, %v409
    %v411 = vrot.slane %v397, %v410
    %v412 = vcombine.low %v388, %v404
    %v413 = vcombine.high %v388, %v404
    %v415 = vunpack.c.l.s4 1934713408
    %v416 = vunpack.c.0.s8 %v415
    %v417 = vlaneseq
    %v418 = vshrl.u32 %v417, 7
    %v419 = vsub.s32 %v416, %v418
    %v420 = vrot.slane %v412, %v419
    %v422 = vunpack.c.l.s4 1934713408
    %v423 = vunpack.c.0.s8 %v422
    %v424 = vlaneseq
    %v425 = vshrl.u32 %v424, 7
    %v426 = vsub.s32 %v423, %v425
    %v427 = vrot.slane %v413, %v426
    %v428 = vcombine.low %v395, %v411
    %v429 = vcombine.high %v395, %v411
    %v431 = vunpack.c.l.s4 1934713408
    %v432 = vunpack.c.0.s8 %v431
    %v433 = vlaneseq
    %v434 = vshrl.u32 %v433, 7
    %v435 = vsub.s32 %v432, %v434
    %v436 = vrot.slane %v428, %v435
    %v438 = vunpack.c.l.s4 1934713408
    %v439 = vunpack.c.0.s8 %v438
    %v440 = vlaneseq
    %v441 = vshrl.u32 %v440, 7
    %v442 = vsub.s32 %v439, %v441
    %v443 = vrot.slane %v429, %v442
    %v444 = vcombine.high %v420, 0.0
    %v445 = vcombine.high %v427, 0.0
    %v446 = vcombine.high %v436, 0.0
    %v447 = vcombine.high %v443, 0.0
    %v448 = vcombine.low %v420, %v427
    %v450 = vunpack.c.l.s4 1983009808
    %v451 = vunpack.c.0.s8 %v450
    %v452 = vlaneseq
    %v453 = vshrl.u32 %v452, 7
    %v454 = vsub.s32 %v451, %v453
    %v455 = vrot.slane %v448, %v454
    %v456 = vcombine.low %v444, %v445
    %v458 = vunpack.c.l.s4 1983009808
    %v459 = vunpack.c.0.s8 %v458
    %v460 = vlaneseq
    %v461 = vshrl.u32 %v460, 7
    %v462 = vsub.s32 %v459, %v461
    %v463 = vrot.slane %v456, %v462
    %v464 = vcombine.low %v436, %v443
    %v466 = vunpack.c.l.s4 1983009808
    %v467 = vunpack.c.0.s8 %v466
    %v468 = vlaneseq
    %v469 = vshrl.u32 %v468, 7
    %v470 = vsub.s32 %v467, %v469
    %v471 = vrot.slane %v464, %v470
    %v472 = vcombine.low %v446, %v447
    %v474 = vunpack.c.l.s4 1983009808
    %v475 = vunpack.c.0.s8 %v474
    %v476 = vlaneseq
    %v477 = vshrl.u32 %v476, 7
    %v478 = vsub.s32 %v475, %v477
    %v479 = vrot.slane %v472, %v478
    %v480 = vcombine.low %v455, %v463
    %v481 = vcombine.high %v455, %v463
    %v483 = vunpack.c.l.s4 1934713408
    %v484 = vunpack.c.0.s8 %v483
    %v485 = vlaneseq
    %v486 = vshrl.u32 %v485, 7
    %v487 = vsub.s32 %v484, %v486
    %v488 = vrot.slane %v480, %v487
    %v490 = vunpack.c.l.s4 1934713408
    %v491 = vunpack.c.0.s8 %v490
    %v492 = vlaneseq
    %v493 = vshrl.u32 %v492, 7
    %v494 = vsub.s32 %v491, %v493
    %v495 = vrot.slane %v481, %v494
    %v496 = vcombine.low %v471, %v479
    %v497 = vcombine.high %v471, %v479
    %v499 = vunpack.c.l.s4 1934713408
    %v500 = vunpack.c.0.s8 %v499
    %v501 = vlaneseq
    %v502 = vshrl.u32 %v501, 7
    %v503 = vsub.s32 %v500, %v502
    %v504 = vrot.slane %v496, %v503
    %v506 = vunpack.c.l.s4 1934713408
    %v507 = vunpack.c.0.s8 %v506
    %v508 = vlaneseq
    %v509 = vshrl.u32 %v508, 7
    %v510 = vsub.s32 %v507, %v509
    %v511 = vrot.slane %v497, %v510
    %v512 = vcombine.low %v488, %v504
    %v513 = vcombine.high %v488, %v504
    %v514 = vcombine.low %v495, %v511
    %v515 = vcombine.high %v495, %v511
    %517 = vrot.lane.b32.xlu0 %v274, 120
    %v518 = vpop.permute.xlu0 %517
    %520 = vrot.lane.b32.xlu0 %v274, 112
    %v521 = vpop.permute.xlu0 %520
    %523 = vrot.lane.b32.xlu0 %v274, 104
    %v524 = vpop.permute.xlu0 %523
    %v526 = vcombine.low %v274, %v521
    %v527 = vcombine.high %v274, %v521
    %v529 = vunpack.c.l.s4 1983009808
    %v530 = vunpack.c.0.s8 %v529
    %v531 = vlaneseq
    %v532 = vshrl.u32 %v531, 7
    %v533 = vsub.s32 %v530, %v532
    %v534 = vrot.slane %v526, %v533
    %v536 = vunpack.c.l.s4 1983009808
    %v537 = vunpack.c.0.s8 %v536
    %v538 = vlaneseq
    %v539 = vshrl.u32 %v538, 7
    %v540 = vsub.s32 %v537, %v539
    %v541 = vrot.slane %v527, %v540
    %v542 = vcombine.low %v518, %v524
    %v543 = vcombine.high %v518, %v524
    %v545 = vunpack.c.l.s4 1983009808
    %v546 = vunpack.c.0.s8 %v545
    %v547 = vlaneseq
    %v548 = vshrl.u32 %v547, 7
    %v549 = vsub.s32 %v546, %v548
    %v550 = vrot.slane %v542, %v549
    %v552 = vunpack.c.l.s4 1983009808
    %v553 = vunpack.c.0.s8 %v552
    %v554 = vlaneseq
    %v555 = vshrl.u32 %v554, 7
    %v556 = vsub.s32 %v553, %v555
    %v557 = vrot.slane %v543, %v556
    %v558 = vcombine.low %v534, %v550
    %v559 = vcombine.high %v534, %v550
    %v561 = vunpack.c.l.s4 1934713408
    %v562 = vunpack.c.0.s8 %v561
    %v563 = vlaneseq
    %v564 = vshrl.u32 %v563, 7
    %v565 = vsub.s32 %v562, %v564
    %v566 = vrot.slane %v558, %v565
    %v568 = vunpack.c.l.s4 1934713408
    %v569 = vunpack.c.0.s8 %v568
    %v570 = vlaneseq
    %v571 = vshrl.u32 %v570, 7
    %v572 = vsub.s32 %v569, %v571
    %v573 = vrot.slane %v559, %v572
    %v574 = vcombine.low %v541, %v557
    %v575 = vcombine.high %v541, %v557
    %v577 = vunpack.c.l.s4 1934713408
    %v578 = vunpack.c.0.s8 %v577
    %v579 = vlaneseq
    %v580 = vshrl.u32 %v579, 7
    %v581 = vsub.s32 %v578, %v580
    %v582 = vrot.slane %v574, %v581
    %v584 = vunpack.c.l.s4 1934713408
    %v585 = vunpack.c.0.s8 %v584
    %v586 = vlaneseq
    %v587 = vshrl.u32 %v586, 7
    %v588 = vsub.s32 %v585, %v587
    %v589 = vrot.slane %v575, %v588
    %v590 = vcombine.high %v566, 0.0
    %v591 = vcombine.high %v573, 0.0
    %v592 = vcombine.high %v582, 0.0
    %v593 = vcombine.high %v589, 0.0
    %v594 = vcombine.low %v566, %v573
    %v596 = vunpack.c.l.s4 1983009808
    %v597 = vunpack.c.0.s8 %v596
    %v598 = vlaneseq
    %v599 = vshrl.u32 %v598, 7
    %v600 = vsub.s32 %v597, %v599
    %v601 = vrot.slane %v594, %v600
    %v602 = vcombine.low %v590, %v591
    %v604 = vunpack.c.l.s4 1983009808
    %v605 = vunpack.c.0.s8 %v604
    %v606 = vlaneseq
    %v607 = vshrl.u32 %v606, 7
    %v608 = vsub.s32 %v605, %v607
    %v609 = vrot.slane %v602, %v608
    %v610 = vcombine.low %v582, %v589
    %v612 = vunpack.c.l.s4 1983009808
    %v613 = vunpack.c.0.s8 %v612
    %v614 = vlaneseq
    %v615 = vshrl.u32 %v614, 7
    %v616 = vsub.s32 %v613, %v615
    %v617 = vrot.slane %v610, %v616
    %v618 = vcombine.low %v592, %v593
    %v620 = vunpack.c.l.s4 1983009808
    %v621 = vunpack.c.0.s8 %v620
    %v622 = vlaneseq
    %v623 = vshrl.u32 %v622, 7
    %v624 = vsub.s32 %v621, %v623
    %v625 = vrot.slane %v618, %v624
    %v626 = vcombine.low %v601, %v609
    %v627 = vcombine.high %v601, %v609
    %v629 = vunpack.c.l.s4 1934713408
    %v630 = vunpack.c.0.s8 %v629
    %v631 = vlaneseq
    %v632 = vshrl.u32 %v631, 7
    %v633 = vsub.s32 %v630, %v632
    %v634 = vrot.slane %v626, %v633
    %v636 = vunpack.c.l.s4 1934713408
    %v637 = vunpack.c.0.s8 %v636
    %v638 = vlaneseq
    %v639 = vshrl.u32 %v638, 7
    %v640 = vsub.s32 %v637, %v639
    %v641 = vrot.slane %v627, %v640
    %v642 = vcombine.low %v617, %v625
    %v643 = vcombine.high %v617, %v625
    %v645 = vunpack.c.l.s4 1934713408
    %v646 = vunpack.c.0.s8 %v645
    %v647 = vlaneseq
    %v648 = vshrl.u32 %v647, 7
    %v649 = vsub.s32 %v646, %v648
    %v650 = vrot.slane %v642, %v649
    %v652 = vunpack.c.l.s4 1934713408
    %v653 = vunpack.c.0.s8 %v652
    %v654 = vlaneseq
    %v655 = vshrl.u32 %v654, 7
    %v656 = vsub.s32 %v653, %v655
    %v657 = vrot.slane %v643, %v656
    %v658 = vcombine.low %v634, %v650
    %v659 = vcombine.high %v634, %v650
    %v660 = vcombine.low %v641, %v657
    %v661 = vcombine.high %v641, %v657
    %663 = vrot.lane.b32.xlu0 %v360, 120
    %v664 = vpop.permute.xlu0 %663
    %666 = vrot.lane.b32.xlu0 %v360, 112
    %v667 = vpop.permute.xlu0 %666
    %669 = vrot.lane.b32.xlu0 %v360, 104
    %v670 = vpop.permute.xlu0 %669
    %v672 = vcombine.low %v360, %v667
    %v673 = vcombine.high %v360, %v667
    %v675 = vunpack.c.l.s4 1983009808
    %v676 = vunpack.c.0.s8 %v675
    %v677 = vlaneseq
    %v678 = vshrl.u32 %v677, 7
    %v679 = vsub.s32 %v676, %v678
    %v680 = vrot.slane %v672, %v679
    %v682 = vunpack.c.l.s4 1983009808
    %v683 = vunpack.c.0.s8 %v682
    %v684 = vlaneseq
    %v685 = vshrl.u32 %v684, 7
    %v686 = vsub.s32 %v683, %v685
    %v687 = vrot.slane %v673, %v686
    %v688 = vcombine.low %v664, %v670
    %v689 = vcombine.high %v664, %v670
    %v691 = vunpack.c.l.s4 1983009808
    %v692 = vunpack.c.0.s8 %v691
    %v693 = vlaneseq
    %v694 = vshrl.u32 %v693, 7
    %v695 = vsub.s32 %v692, %v694
    %v696 = vrot.slane %v688, %v695
    %v698 = vunpack.c.l.s4 1983009808
    %v699 = vunpack.c.0.s8 %v698
    %v700 = vlaneseq
    %v701 = vshrl.u32 %v700, 7
    %v702 = vsub.s32 %v699, %v701
    %v703 = vrot.slane %v689, %v702
    %v704 = vcombine.low %v680, %v696
    %v705 = vcombine.high %v680, %v696
    %v707 = vunpack.c.l.s4 1934713408
    %v708 = vunpack.c.0.s8 %v707
    %v709 = vlaneseq
    %v710 = vshrl.u32 %v709, 7
    %v711 = vsub.s32 %v708, %v710
    %v712 = vrot.slane %v704, %v711
    %v714 = vunpack.c.l.s4 1934713408
    %v715 = vunpack.c.0.s8 %v714
    %v716 = vlaneseq
    %v717 = vshrl.u32 %v716, 7
    %v718 = vsub.s32 %v715, %v717
    %v719 = vrot.slane %v705, %v718
    %v720 = vcombine.low %v687, %v703
    %v721 = vcombine.high %v687, %v703
    %v723 = vunpack.c.l.s4 1934713408
    %v724 = vunpack.c.0.s8 %v723
    %v725 = vlaneseq
    %v726 = vshrl.u32 %v725, 7
    %v727 = vsub.s32 %v724, %v726
    %v728 = vrot.slane %v720, %v727
    %v730 = vunpack.c.l.s4 1934713408
    %v731 = vunpack.c.0.s8 %v730
    %v732 = vlaneseq
    %v733 = vshrl.u32 %v732, 7
    %v734 = vsub.s32 %v731, %v733
    %v735 = vrot.slane %v721, %v734
    %v736 = vcombine.high %v712, 0.0
    %v737 = vcombine.high %v719, 0.0
    %v738 = vcombine.high %v728, 0.0
    %v739 = vcombine.high %v735, 0.0
    %v740 = vcombine.low %v712, %v719
    %v742 = vunpack.c.l.s4 1983009808
    %v743 = vunpack.c.0.s8 %v742
    %v744 = vlaneseq
    %v745 = vshrl.u32 %v744, 7
    %v746 = vsub.s32 %v743, %v745
    %v747 = vrot.slane %v740, %v746
    %v748 = vcombine.low %v736, %v737
    %v750 = vunpack.c.l.s4 1983009808
    %v751 = vunpack.c.0.s8 %v750
    %v752 = vlaneseq
    %v753 = vshrl.u32 %v752, 7
    %v754 = vsub.s32 %v751, %v753
    %v755 = vrot.slane %v748, %v754
    %v756 = vcombine.low %v728, %v735
    %v758 = vunpack.c.l.s4 1983009808
    %v759 = vunpack.c.0.s8 %v758
    %v760 = vlaneseq
    %v761 = vshrl.u32 %v760, 7
    %v762 = vsub.s32 %v759, %v761
    %v763 = vrot.slane %v756, %v762
    %v764 = vcombine.low %v738, %v739
    %v766 = vunpack.c.l.s4 1983009808
    %v767 = vunpack.c.0.s8 %v766
    %v768 = vlaneseq
    %v769 = vshrl.u32 %v768, 7
    %v770 = vsub.s32 %v767, %v769
    %v771 = vrot.slane %v764, %v770
    %v772 = vcombine.low %v747, %v755
    %v773 = vcombine.high %v747, %v755
    %v775 = vunpack.c.l.s4 1934713408
    %v776 = vunpack.c.0.s8 %v775
    %v777 = vlaneseq
    %v778 = vshrl.u32 %v777, 7
    %v779 = vsub.s32 %v776, %v778
    %v780 = vrot.slane %v772, %v779
    %v782 = vunpack.c.l.s4 1934713408
    %v783 = vunpack.c.0.s8 %v782
    %v784 = vlaneseq
    %v785 = vshrl.u32 %v784, 7
    %v786 = vsub.s32 %v783, %v785
    %v787 = vrot.slane %v773, %v786
    %v788 = vcombine.low %v763, %v771
    %v789 = vcombine.high %v763, %v771
    %v791 = vunpack.c.l.s4 1934713408
    %v792 = vunpack.c.0.s8 %v791
    %v793 = vlaneseq
    %v794 = vshrl.u32 %v793, 7
    %v795 = vsub.s32 %v792, %v794
    %v796 = vrot.slane %v788, %v795
    %v798 = vunpack.c.l.s4 1934713408
    %v799 = vunpack.c.0.s8 %v798
    %v800 = vlaneseq
    %v801 = vshrl.u32 %v800, 7
    %v802 = vsub.s32 %v799, %v801
    %v803 = vrot.slane %v789, %v802
    %v804 = vcombine.low %v780, %v796
    %v805 = vcombine.high %v780, %v796
    %v806 = vcombine.low %v787, %v803
    %v807 = vcombine.high %v787, %v803
    %vm808 = vcmask 64512
    %v810 = vsel %vm808, %v512, 0
    %v813 = vsel %vm808, %v658, 0
    %815 = vmatprep.subr.mxu0 0.0
    %816 = vmatpush1.xpose.msra.mxu0 %v813
    %817 = vmatprep.subr.mxu0 0.0
    %818 = vmatpush1.xpose.msra.mxu0 0.0
    %819 = vmatprep.subr.mxu0 0.0
    %820 = vmatpush1.xpose.msra.mxu0 0.0
    %821 = vmatprep.subr.mxu0 0.0
    %822 = vmatpush1.xpose.msra.mxu0 0.0
    %823 = vmatprep.subr.mxu0 0.0
    %824 = vmatpush1.xpose.msra.mxu0 0.0
    %825 = vmatprep.subr.mxu0 0.0
    %826 = vmatpush1.xpose.msra.mxu0 0.0
    %827 = vmatprep.subr.mxu0 0.0
    %828 = vmatpush1.xpose.msra.mxu0 0.0
    %829 = vmatprep.subr.mxu0 0.0
    %830 = vmatpush1.xpose.msra.mxu0 0.0
    %831 = vmatprep.subr.mxu0 0.0
    %832 = vmatpush1.xpose.msra.mxu0 0.0
    %833 = vmatprep.subr.mxu0 0.0
    %834 = vmatpush1.xpose.msra.mxu0 0.0
    %835 = vmatprep.subr.mxu0 0.0
    %836 = vmatpush1.xpose.msra.mxu0 0.0
    %837 = vmatprep.subr.mxu0 0.0
    %838 = vmatpush1.xpose.msra.mxu0 0.0
    %839 = vmatprep.subr.mxu0 0.0
    %840 = vmatpush1.xpose.msra.mxu0 0.0
    %841 = vmatprep.subr.mxu0 0.0
    %842 = vmatpush1.xpose.msra.mxu0 0.0
    %843 = vmatprep.subr.mxu0 0.0
    %844 = vmatpush1.xpose.msra.mxu0 0.0
    %845 = vmatprep.subr.mxu0 0.0
    %846 = vmatpush1.xpose.msra.mxu0 0.0
    %847 = vmatprep.subr.mxu0 0.0
    %848 = vmatpush1.xpose.msra.mxu0 0.0
    %849 = vmatprep.subr.mxu0 0.0
    %850 = vmatpush1.xpose.msra.mxu0 0.0
    %851 = vmatprep.subr.mxu0 0.0
    %852 = vmatpush1.xpose.msra.mxu0 0.0
    %853 = vmatprep.subr.mxu0 0.0
    %854 = vmatpush1.xpose.msra.mxu0 0.0
    %855 = vmatprep.subr.mxu0 0.0
    %856 = vmatpush1.xpose.msra.mxu0 0.0
    %857 = vmatprep.subr.mxu0 0.0
    %858 = vmatpush1.xpose.msra.mxu0 0.0
    %859 = vmatprep.subr.mxu0 0.0
    %860 = vmatpush1.xpose.msra.mxu0 0.0
    %861 = vmatprep.subr.mxu0 0.0
    %862 = vmatpush1.xpose.msra.mxu0 0.0
    %863 = vmatprep.subr.mxu0 0.0
    %864 = vmatpush1.xpose.msra.mxu0 0.0
    %865 = vmatprep.subr.mxu0 0.0
    %866 = vmatpush1.xpose.msra.mxu0 0.0
    %867 = vmatprep.subr.mxu0 0.0
    %868 = vmatpush1.xpose.msra.mxu0 0.0
    %869 = vmatprep.subr.mxu0 0.0
    %870 = vmatpush1.xpose.msra.mxu0 0.0
    %871 = vmatprep.subr.mxu0 0.0
    %872 = vmatpush1.xpose.msra.mxu0 0.0
    %873 = vmatprep.subr.mxu0 0.0
    %874 = vmatpush1.xpose.msra.mxu0 0.0
    %875 = vmatprep.subr.mxu0 0.0
    %876 = vmatpush1.xpose.msra.mxu0 0.0
    %877 = vmatprep.subr.mxu0 0.0
    %878 = vmatpush1.xpose.msra.mxu0 0.0
    %879 = vmatprep.mubr.f32.mxu0 0.0
    %880 = vmatmul.mubr.f32.gmra.mrb[0].mxu0 %v810
    %v881 = vpop.f32.mrb[0].mxu0
    %v882 = vadd.f32 0.0, %v881
    %v883 = vpop.f32.mrb[0].mxu0
    %884 = vdwg.mxu0
    %v886 = vsel %vm808, %v513, 0
    %v889 = vsel %vm808, %v659, 0
    %891 = vmatprep.subr.mxu0 0.0
    %892 = vmatpush1.xpose.msra.mxu0 %v889
    %893 = vmatprep.subr.mxu0 0.0
    %894 = vmatpush1.xpose.msra.mxu0 0.0
    %895 = vmatprep.subr.mxu0 0.0
    %896 = vmatpush1.xpose.msra.mxu0 0.0
    %897 = vmatprep.subr.mxu0 0.0
    %898 = vmatpush1.xpose.msra.mxu0 0.0
    %899 = vmatprep.subr.mxu0 0.0
    %900 = vmatpush1.xpose.msra.mxu0 0.0
    %901 = vmatprep.subr.mxu0 0.0
    %902 = vmatpush1.xpose.msra.mxu0 0.0
    %903 = vmatprep.subr.mxu0 0.0
    %904 = vmatpush1.xpose.msra.mxu0 0.0
    %905 = vmatprep.subr.mxu0 0.0
    %906 = vmatpush1.xpose.msra.mxu0 0.0
    %907 = vmatprep.subr.mxu0 0.0
    %908 = vmatpush1.xpose.msra.mxu0 0.0
    %909 = vmatprep.subr.mxu0 0.0
    %910 = vmatpush1.xpose.msra.mxu0 0.0
    %911 = vmatprep.subr.mxu0 0.0
    %912 = vmatpush1.xpose.msra.mxu0 0.0
    %913 = vmatprep.subr.mxu0 0.0
    %914 = vmatpush1.xpose.msra.mxu0 0.0
    %915 = vmatprep.subr.mxu0 0.0
    %916 = vmatpush1.xpose.msra.mxu0 0.0
    %917 = vmatprep.subr.mxu0 0.0
    %918 = vmatpush1.xpose.msra.mxu0 0.0
    %919 = vmatprep.subr.mxu0 0.0
    %920 = vmatpush1.xpose.msra.mxu0 0.0
    %921 = vmatprep.subr.mxu0 0.0
    %922 = vmatpush1.xpose.msra.mxu0 0.0
    %923 = vmatprep.subr.mxu0 0.0
    %924 = vmatpush1.xpose.msra.mxu0 0.0
    %925 = vmatprep.subr.mxu0 0.0
    %926 = vmatpush1.xpose.msra.mxu0 0.0
    %927 = vmatprep.subr.mxu0 0.0
    %928 = vmatpush1.xpose.msra.mxu0 0.0
    %929 = vmatprep.subr.mxu0 0.0
    %930 = vmatpush1.xpose.msra.mxu0 0.0
    %931 = vmatprep.subr.mxu0 0.0
    %932 = vmatpush1.xpose.msra.mxu0 0.0
    %933 = vmatprep.subr.mxu0 0.0
    %934 = vmatpush1.xpose.msra.mxu0 0.0
    %935 = vmatprep.subr.mxu0 0.0
    %936 = vmatpush1.xpose.msra.mxu0 0.0
    %937 = vmatprep.subr.mxu0 0.0
    %938 = vmatpush1.xpose.msra.mxu0 0.0
    %939 = vmatprep.subr.mxu0 0.0
    %940 = vmatpush1.xpose.msra.mxu0 0.0
    %941 = vmatprep.subr.mxu0 0.0
    %942 = vmatpush1.xpose.msra.mxu0 0.0
    %943 = vmatprep.subr.mxu0 0.0
    %944 = vmatpush1.xpose.msra.mxu0 0.0
    %945 = vmatprep.subr.mxu0 0.0
    %946 = vmatpush1.xpose.msra.mxu0 0.0
    %947 = vmatprep.subr.mxu0 0.0
    %948 = vmatpush1.xpose.msra.mxu0 0.0
    %949 = vmatprep.subr.mxu0 0.0
    %950 = vmatpush1.xpose.msra.mxu0 0.0
    %951 = vmatprep.subr.mxu0 0.0
    %952 = vmatpush1.xpose.msra.mxu0 0.0
    %953 = vmatprep.subr.mxu0 0.0
    %954 = vmatpush1.xpose.msra.mxu0 0.0
    %955 = vmatprep.mubr.f32.mxu0 0.0
    %956 = vmatmul.mubr.f32.gmra.mrb[0].mxu0 %v886
    %v957 = vpop.f32.mrb[0].mxu0
    %v958 = vadd.f32 0.0, %v957
    %v959 = vpop.f32.mrb[0].mxu0
    %960 = vdwg.mxu0
    %v962 = vsel %vm808, %v514, 0
    %v965 = vsel %vm808, %v660, 0
    %967 = vmatprep.subr.mxu0 0.0
    %968 = vmatpush1.xpose.msra.mxu0 %v965
    %969 = vmatprep.subr.mxu0 0.0
    %970 = vmatpush1.xpose.msra.mxu0 0.0
    %971 = vmatprep.subr.mxu0 0.0
    %972 = vmatpush1.xpose.msra.mxu0 0.0
    %973 = vmatprep.subr.mxu0 0.0
    %974 = vmatpush1.xpose.msra.mxu0 0.0
    %975 = vmatprep.subr.mxu0 0.0
    %976 = vmatpush1.xpose.msra.mxu0 0.0
    %977 = vmatprep.subr.mxu0 0.0
    %978 = vmatpush1.xpose.msra.mxu0 0.0
    %979 = vmatprep.subr.mxu0 0.0
    %980 = vmatpush1.xpose.msra.mxu0 0.0
    %981 = vmatprep.subr.mxu0 0.0
    %982 = vmatpush1.xpose.msra.mxu0 0.0
    %983 = vmatprep.subr.mxu0 0.0
    %984 = vmatpush1.xpose.msra.mxu0 0.0
    %985 = vmatprep.subr.mxu0 0.0
    %986 = vmatpush1.xpose.msra.mxu0 0.0
    %987 = vmatprep.subr.mxu0 0.0
    %988 = vmatpush1.xpose.msra.mxu0 0.0
    %989 = vmatprep.subr.mxu0 0.0
    %990 = vmatpush1.xpose.msra.mxu0 0.0
    %991 = vmatprep.subr.mxu0 0.0
    %992 = vmatpush1.xpose.msra.mxu0 0.0
    %993 = vmatprep.subr.mxu0 0.0
    %994 = vmatpush1.xpose.msra.mxu0 0.0
    %995 = vmatprep.subr.mxu0 0.0
    %996 = vmatpush1.xpose.msra.mxu0 0.0
    %997 = vmatprep.subr.mxu0 0.0
    %998 = vmatpush1.xpose.msra.mxu0 0.0
    %999 = vmatprep.subr.mxu0 0.0
    %1000 = vmatpush1.xpose.msra.mxu0 0.0
    %1001 = vmatprep.subr.mxu0 0.0
    %1002 = vmatpush1.xpose.msra.mxu0 0.0
    %1003 = vmatprep.subr.mxu0 0.0
    %1004 = vmatpush1.xpose.msra.mxu0 0.0
    %1005 = vmatprep.subr.mxu0 0.0
    %1006 = vmatpush1.xpose.msra.mxu0 0.0
    %1007 = vmatprep.subr.mxu0 0.0
    %1008 = vmatpush1.xpose.msra.mxu0 0.0
    %1009 = vmatprep.subr.mxu0 0.0
    %1010 = vmatpush1.xpose.msra.mxu0 0.0
    %1011 = vmatprep.subr.mxu0 0.0
    %1012 = vmatpush1.xpose.msra.mxu0 0.0
    %1013 = vmatprep.subr.mxu0 0.0
    %1014 = vmatpush1.xpose.msra.mxu0 0.0
    %1015 = vmatprep.subr.mxu0 0.0
    %1016 = vmatpush1.xpose.msra.mxu0 0.0
    %1017 = vmatprep.subr.mxu0 0.0
    %1018 = vmatpush1.xpose.msra.mxu0 0.0
    %1019 = vmatprep.subr.mxu0 0.0
    %1020 = vmatpush1.xpose.msra.mxu0 0.0
    %1021 = vmatprep.subr.mxu0 0.0
    %1022 = vmatpush1.xpose.msra.mxu0 0.0
    %1023 = vmatprep.subr.mxu0 0.0
    %1024 = vmatpush1.xpose.msra.mxu0 0.0
    %1025 = vmatprep.subr.mxu0 0.0
    %1026 = vmatpush1.xpose.msra.mxu0 0.0
    %1027 = vmatprep.subr.mxu0 0.0
    %1028 = vmatpush1.xpose.msra.mxu0 0.0
    %1029 = vmatprep.subr.mxu0 0.0
    %1030 = vmatpush1.xpose.msra.mxu0 0.0
    %1031 = vmatprep.mubr.f32.mxu0 0.0
    %1032 = vmatmul.mubr.f32.gmra.mrb[0].mxu0 %v962
    %v1033 = vpop.f32.mrb[0].mxu0
    %v1034 = vadd.f32 0.0, %v1033
    %v1035 = vpop.f32.mrb[0].mxu0
    %1036 = vdwg.mxu0
    %v1038 = vsel %vm808, %v515, 0
    %v1041 = vsel %vm808, %v661, 0
    %1043 = vmatprep.subr.mxu0 0.0
    %1044 = vmatpush1.xpose.msra.mxu0 %v1041
    %1045 = vmatprep.subr.mxu0 0.0
    %1046 = vmatpush1.xpose.msra.mxu0 0.0
    %1047 = vmatprep.subr.mxu0 0.0
    %1048 = vmatpush1.xpose.msra.mxu0 0.0
    %1049 = vmatprep.subr.mxu0 0.0
    %1050 = vmatpush1.xpose.msra.mxu0 0.0
    %1051 = vmatprep.subr.mxu0 0.0
    %1052 = vmatpush1.xpose.msra.mxu0 0.0
    %1053 = vmatprep.subr.mxu0 0.0
    %1054 = vmatpush1.xpose.msra.mxu0 0.0
    %1055 = vmatprep.subr.mxu0 0.0
    %1056 = vmatpush1.xpose.msra.mxu0 0.0
    %1057 = vmatprep.subr.mxu0 0.0
    %1058 = vmatpush1.xpose.msra.mxu0 0.0
    %1059 = vmatprep.subr.mxu0 0.0
    %1060 = vmatpush1.xpose.msra.mxu0 0.0
    %1061 = vmatprep.subr.mxu0 0.0
    %1062 = vmatpush1.xpose.msra.mxu0 0.0
    %1063 = vmatprep.subr.mxu0 0.0
    %1064 = vmatpush1.xpose.msra.mxu0 0.0
    %1065 = vmatprep.subr.mxu0 0.0
    %1066 = vmatpush1.xpose.msra.mxu0 0.0
    %1067 = vmatprep.subr.mxu0 0.0
    %1068 = vmatpush1.xpose.msra.mxu0 0.0
    %1069 = vmatprep.subr.mxu0 0.0
    %1070 = vmatpush1.xpose.msra.mxu0 0.0
    %1071 = vmatprep.subr.mxu0 0.0
    %1072 = vmatpush1.xpose.msra.mxu0 0.0
    %1073 = vmatprep.subr.mxu0 0.0
    %1074 = vmatpush1.xpose.msra.mxu0 0.0
    %1075 = vmatprep.subr.mxu0 0.0
    %1076 = vmatpush1.xpose.msra.mxu0 0.0
    %1077 = vmatprep.subr.mxu0 0.0
    %1078 = vmatpush1.xpose.msra.mxu0 0.0
    %1079 = vmatprep.subr.mxu0 0.0
    %1080 = vmatpush1.xpose.msra.mxu0 0.0
    %1081 = vmatprep.subr.mxu0 0.0
    %1082 = vmatpush1.xpose.msra.mxu0 0.0
    %1083 = vmatprep.subr.mxu0 0.0
    %1084 = vmatpush1.xpose.msra.mxu0 0.0
    %1085 = vmatprep.subr.mxu0 0.0
    %1086 = vmatpush1.xpose.msra.mxu0 0.0
    %1087 = vmatprep.subr.mxu0 0.0
    %1088 = vmatpush1.xpose.msra.mxu0 0.0
    %1089 = vmatprep.subr.mxu0 0.0
    %1090 = vmatpush1.xpose.msra.mxu0 0.0
    %1091 = vmatprep.subr.mxu0 0.0
    %1092 = vmatpush1.xpose.msra.mxu0 0.0
    %1093 = vmatprep.subr.mxu0 0.0
    %1094 = vmatpush1.xpose.msra.mxu0 0.0
    %1095 = vmatprep.subr.mxu0 0.0
    %1096 = vmatpush1.xpose.msra.mxu0 0.0
    %1097 = vmatprep.subr.mxu0 0.0
    %1098 = vmatpush1.xpose.msra.mxu0 0.0
    %1099 = vmatprep.subr.mxu0 0.0
    %1100 = vmatpush1.xpose.msra.mxu0 0.0
    %1101 = vmatprep.subr.mxu0 0.0
    %1102 = vmatpush1.xpose.msra.mxu0 0.0
    %1103 = vmatprep.subr.mxu0 0.0
    %1104 = vmatpush1.xpose.msra.mxu0 0.0
    %1105 = vmatprep.subr.mxu0 0.0
    %1106 = vmatpush1.xpose.msra.mxu0 0.0
    %1107 = vmatprep.mubr.f32.mxu0 0.0
    %1108 = vmatmul.mubr.f32.gmra.mrb[0].mxu0 %v1038
    %v1109 = vpop.f32.mrb[0].mxu0
    %v1110 = vadd.f32 0.0, %v1109
    %v1111 = vpop.f32.mrb[0].mxu0
    %1112 = vdwg.mxu0
    %v1113 = vsel %vm808, %v882, -inf
    %1114 = vmax.xlane.f32.xlu0 %v1113
    %v1115 = vpop.xlane.xlu0 %1114
    %v1116 = vsel %vm808, %v958, -inf
    %1117 = vmax.xlane.f32.xlu0 %v1116
    %v1118 = vpop.xlane.xlu0 %1117
    %v1119 = vsel %vm808, %v1034, -inf
    %1120 = vmax.xlane.f32.xlu0 %v1119
    %v1121 = vpop.xlane.xlu0 %1120
    %v1122 = vsel %vm808, %v1110, -inf
    %1123 = vmax.xlane.f32.xlu0 %v1122
    %v1124 = vpop.xlane.xlu0 %1123
    %v1125 = vsub.f32 %v882, %v1115
    %v1126 = vsub.f32 %v958, %v1118
    %v1127 = vsub.f32 %v1034, %v1121
    %v1128 = vsub.f32 %v1110, %v1124
    %v1129 = vmul.f32 %v1125, 1.442695
    %v1130 = vpow.pop %v1129
    %v1131 = vmul.f32 %v1126, 1.442695
    %v1132 = vpow.pop %v1131
    %v1133 = vmul.f32 %v1127, 1.442695
    %v1134 = vpow.pop %v1133
    %v1135 = vmul.f32 %v1128, 1.442695
    %v1136 = vpow.pop %v1135
    %v1137 = vsel %vm808, %v1130, 0.0
    %1138 = vadd.xlane.f32.xlu0 %v1137
    %v1139 = vpop.xlane.xlu0 %1138
    %v1140 = vsel %vm808, %v1132, 0.0
    %1141 = vadd.xlane.f32.xlu0 %v1140
    %v1142 = vpop.xlane.xlu0 %1141
    %v1143 = vsel %vm808, %v1134, 0.0
    %1144 = vadd.xlane.f32.xlu0 %v1143
    %v1145 = vpop.xlane.xlu0 %1144
    %v1146 = vsel %vm808, %v1136, 0.0
    %1147 = vadd.xlane.f32.xlu0 %v1146
    %v1148 = vpop.xlane.xlu0 %1147
    %v1149 = vrcp.pop %v1139
    %v1150 = vrcp.pop %v1142
    %v1151 = vrcp.pop %v1145
    %v1152 = vrcp.pop %v1148
    %v1153 = vmul.f32 %v1130, %v1149
    %v1154 = vmul.f32 %v1132, %v1150
    %v1155 = vmul.f32 %v1134, %v1151
    %v1156 = vmul.f32 %v1136, %v1152
    %v1158 = vsel %vm808, %v1153, 0
    %1160 = vmatprep.subr.mxu0 0.0
    %1161 = vmatpush1.msra.mxu0 %v804
    %1162 = vmatprep.subr.mxu0 0.0
    %1163 = vmatpush1.msra.mxu0 0.0
    %1164 = vmatprep.subr.mxu0 0.0
    %1165 = vmatpush1.msra.mxu0 0.0
    %1166 = vmatprep.subr.mxu0 0.0
    %1167 = vmatpush1.msra.mxu0 0.0
    %1168 = vmatprep.subr.mxu0 0.0
    %1169 = vmatpush1.msra.mxu0 0.0
    %1170 = vmatprep.subr.mxu0 0.0
    %1171 = vmatpush1.msra.mxu0 0.0
    %1172 = vmatprep.subr.mxu0 0.0
    %1173 = vmatpush1.msra.mxu0 0.0
    %1174 = vmatprep.subr.mxu0 0.0
    %1175 = vmatpush1.msra.mxu0 0.0
    %1176 = vmatprep.subr.mxu0 0.0
    %1177 = vmatpush1.msra.mxu0 0.0
    %1178 = vmatprep.subr.mxu0 0.0
    %1179 = vmatpush1.msra.mxu0 0.0
    %1180 = vmatprep.subr.mxu0 0.0
    %1181 = vmatpush1.msra.mxu0 0.0
    %1182 = vmatprep.subr.mxu0 0.0
    %1183 = vmatpush1.msra.mxu0 0.0
    %1184 = vmatprep.subr.mxu0 0.0
    %1185 = vmatpush1.msra.mxu0 0.0
    %1186 = vmatprep.subr.mxu0 0.0
    %1187 = vmatpush1.msra.mxu0 0.0
    %1188 = vmatprep.subr.mxu0 0.0
    %1189 = vmatpush1.msra.mxu0 0.0
    %1190 = vmatprep.subr.mxu0 0.0
    %1191 = vmatpush1.msra.mxu0 0.0
    %1192 = vmatprep.subr.mxu0 0.0
    %1193 = vmatpush1.msra.mxu0 0.0
    %1194 = vmatprep.subr.mxu0 0.0
    %1195 = vmatpush1.msra.mxu0 0.0
    %1196 = vmatprep.subr.mxu0 0.0
    %1197 = vmatpush1.msra.mxu0 0.0
    %1198 = vmatprep.subr.mxu0 0.0
    %1199 = vmatpush1.msra.mxu0 0.0
    %1200 = vmatprep.subr.mxu0 0.0
    %1201 = vmatpush1.msra.mxu0 0.0
    %1202 = vmatprep.subr.mxu0 0.0
    %1203 = vmatpush1.msra.mxu0 0.0
    %1204 = vmatprep.subr.mxu0 0.0
    %1205 = vmatpush1.msra.mxu0 0.0
    %1206 = vmatprep.subr.mxu0 0.0
    %1207 = vmatpush1.msra.mxu0 0.0
    %1208 = vmatprep.subr.mxu0 0.0
    %1209 = vmatpush1.msra.mxu0 0.0
    %1210 = vmatprep.subr.mxu0 0.0
    %1211 = vmatpush1.msra.mxu0 0.0
    %1212 = vmatprep.subr.mxu0 0.0
    %1213 = vmatpush1.msra.mxu0 0.0
    %1214 = vmatprep.subr.mxu0 0.0
    %1215 = vmatpush1.msra.mxu0 0.0
    %1216 = vmatprep.subr.mxu0 0.0
    %1217 = vmatpush1.msra.mxu0 0.0
    %1218 = vmatprep.subr.mxu0 0.0
    %1219 = vmatpush1.msra.mxu0 0.0
    %1220 = vmatprep.subr.mxu0 0.0
    %1221 = vmatpush1.msra.mxu0 0.0
    %1222 = vmatprep.subr.mxu0 0.0
    %1223 = vmatpush1.msra.mxu0 0.0
    %1224 = vmatprep.mubr.f32.mxu0 0.0
    %1225 = vmatmul.mubr.f32.gmra.mrb[0].mxu0 %v1158
    %v1226 = vpop.f32.mrb[0].mxu0
    %v1227 = vadd.f32 0.0, %v1226
    %v1228 = vpop.f32.mrb[0].mxu0
    %1229 = vdwg.mxu0
    %v1231 = vsel %vm808, %v1154, 0
    %1233 = vmatprep.subr.mxu0 0.0
    %1234 = vmatpush1.msra.mxu0 %v805
    %1235 = vmatprep.subr.mxu0 0.0
    %1236 = vmatpush1.msra.mxu0 0.0
    %1237 = vmatprep.subr.mxu0 0.0
    %1238 = vmatpush1.msra.mxu0 0.0
    %1239 = vmatprep.subr.mxu0 0.0
    %1240 = vmatpush1.msra.mxu0 0.0
    %1241 = vmatprep.subr.mxu0 0.0
    %1242 = vmatpush1.msra.mxu0 0.0
    %1243 = vmatprep.subr.mxu0 0.0
    %1244 = vmatpush1.msra.mxu0 0.0
    %1245 = vmatprep.subr.mxu0 0.0
    %1246 = vmatpush1.msra.mxu0 0.0
    %1247 = vmatprep.subr.mxu0 0.0
    %1248 = vmatpush1.msra.mxu0 0.0
    %1249 = vmatprep.subr.mxu0 0.0
    %1250 = vmatpush1.msra.mxu0 0.0
    %1251 = vmatprep.subr.mxu0 0.0
    %1252 = vmatpush1.msra.mxu0 0.0
    %1253 = vmatprep.subr.mxu0 0.0
    %1254 = vmatpush1.msra.mxu0 0.0
    %1255 = vmatprep.subr.mxu0 0.0
    %1256 = vmatpush1.msra.mxu0 0.0
    %1257 = vmatprep.subr.mxu0 0.0
    %1258 = vmatpush1.msra.mxu0 0.0
    %1259 = vmatprep.subr.mxu0 0.0
    %1260 = vmatpush1.msra.mxu0 0.0
    %1261 = vmatprep.subr.mxu0 0.0
    %1262 = vmatpush1.msra.mxu0 0.0
    %1263 = vmatprep.subr.mxu0 0.0
    %1264 = vmatpush1.msra.mxu0 0.0
    %1265 = vmatprep.subr.mxu0 0.0
    %1266 = vmatpush1.msra.mxu0 0.0
    %1267 = vmatprep.subr.mxu0 0.0
    %1268 = vmatpush1.msra.mxu0 0.0
    %1269 = vmatprep.subr.mxu0 0.0
    %1270 = vmatpush1.msra.mxu0 0.0
    %1271 = vmatprep.subr.mxu0 0.0
    %1272 = vmatpush1.msra.mxu0 0.0
    %1273 = vmatprep.subr.mxu0 0.0
    %1274 = vmatpush1.msra.mxu0 0.0
    %1275 = vmatprep.subr.mxu0 0.0
    %1276 = vmatpush1.msra.mxu0 0.0
    %1277 = vmatprep.subr.mxu0 0.0
    %1278 = vmatpush1.msra.mxu0 0.0
    %1279 = vmatprep.subr.mxu0 0.0
    %1280 = vmatpush1.msra.mxu0 0.0
    %1281 = vmatprep.subr.mxu0 0.0
    %1282 = vmatpush1.msra.mxu0 0.0
    %1283 = vmatprep.subr.mxu0 0.0
    %1284 = vmatpush1.msra.mxu0 0.0
    %1285 = vmatprep.subr.mxu0 0.0
    %1286 = vmatpush1.msra.mxu0 0.0
    %1287 = vmatprep.subr.mxu0 0.0
    %1288 = vmatpush1.msra.mxu0 0.0
    %1289 = vmatprep.subr.mxu0 0.0
    %1290 = vmatpush1.msra.mxu0 0.0
    %1291 = vmatprep.subr.mxu0 0.0
    %1292 = vmatpush1.msra.mxu0 0.0
    %1293 = vmatprep.subr.mxu0 0.0
    %1294 = vmatpush1.msra.mxu0 0.0
    %1295 = vmatprep.subr.mxu0 0.0
    %1296 = vmatpush1.msra.mxu0 0.0
    %1297 = vmatprep.mubr.f32.mxu0 0.0
    %1298 = vmatmul.mubr.f32.gmra.mrb[0].mxu0 %v1231
    %v1299 = vpop.f32.mrb[0].mxu0
    %v1300 = vadd.f32 0.0, %v1299
    %v1301 = vpop.f32.mrb[0].mxu0
    %1302 = vdwg.mxu0
    %v1304 = vsel %vm808, %v1155, 0
    %1306 = vmatprep.subr.mxu0 0.0
    %1307 = vmatpush1.msra.mxu0 %v806
    %1308 = vmatprep.subr.mxu0 0.0
    %1309 = vmatpush1.msra.mxu0 0.0
    %1310 = vmatprep.subr.mxu0 0.0
    %1311 = vmatpush1.msra.mxu0 0.0
    %1312 = vmatprep.subr.mxu0 0.0
    %1313 = vmatpush1.msra.mxu0 0.0
    %1314 = vmatprep.subr.mxu0 0.0
    %1315 = vmatpush1.msra.mxu0 0.0
    %1316 = vmatprep.subr.mxu0 0.0
    %1317 = vmatpush1.msra.mxu0 0.0
    %1318 = vmatprep.subr.mxu0 0.0
    %1319 = vmatpush1.msra.mxu0 0.0
    %1320 = vmatprep.subr.mxu0 0.0
    %1321 = vmatpush1.msra.mxu0 0.0
    %1322 = vmatprep.subr.mxu0 0.0
    %1323 = vmatpush1.msra.mxu0 0.0
    %1324 = vmatprep.subr.mxu0 0.0
    %1325 = vmatpush1.msra.mxu0 0.0
    %1326 = vmatprep.subr.mxu0 0.0
    %1327 = vmatpush1.msra.mxu0 0.0
    %1328 = vmatprep.subr.mxu0 0.0
    %1329 = vmatpush1.msra.mxu0 0.0
    %1330 = vmatprep.subr.mxu0 0.0
    %1331 = vmatpush1.msra.mxu0 0.0
    %1332 = vmatprep.subr.mxu0 0.0
    %1333 = vmatpush1.msra.mxu0 0.0
    %1334 = vmatprep.subr.mxu0 0.0
    %1335 = vmatpush1.msra.mxu0 0.0
    %1336 = vmatprep.subr.mxu0 0.0
    %1337 = vmatpush1.msra.mxu0 0.0
    %1338 = vmatprep.subr.mxu0 0.0
    %1339 = vmatpush1.msra.mxu0 0.0
    %1340 = vmatprep.subr.mxu0 0.0
    %1341 = vmatpush1.msra.mxu0 0.0
    %1342 = vmatprep.subr.mxu0 0.0
    %1343 = vmatpush1.msra.mxu0 0.0
    %1344 = vmatprep.subr.mxu0 0.0
    %1345 = vmatpush1.msra.mxu0 0.0
    %1346 = vmatprep.subr.mxu0 0.0
    %1347 = vmatpush1.msra.mxu0 0.0
    %1348 = vmatprep.subr.mxu0 0.0
    %1349 = vmatpush1.msra.mxu0 0.0
    %1350 = vmatprep.subr.mxu0 0.0
    %1351 = vmatpush1.msra.mxu0 0.0
    %1352 = vmatprep.subr.mxu0 0.0
    %1353 = vmatpush1.msra.mxu0 0.0
    %1354 = vmatprep.subr.mxu0 0.0
    %1355 = vmatpush1.msra.mxu0 0.0
    %1356 = vmatprep.subr.mxu0 0.0
    %1357 = vmatpush1.msra.mxu0 0.0
    %1358 = vmatprep.subr.mxu0 0.0
    %1359 = vmatpush1.msra.mxu0 0.0
    %1360 = vmatprep.subr.mxu0 0.0
    %1361 = vmatpush1.msra.mxu0 0.0
    %1362 = vmatprep.subr.mxu0 0.0
    %1363 = vmatpush1.msra.mxu0 0.0
    %1364 = vmatprep.subr.mxu0 0.0
    %1365 = vmatpush1.msra.mxu0 0.0
    %1366 = vmatprep.subr.mxu0 0.0
    %1367 = vmatpush1.msra.mxu0 0.0
    %1368 = vmatprep.subr.mxu0 0.0
    %1369 = vmatpush1.msra.mxu0 0.0
    %1370 = vmatprep.mubr.f32.mxu0 0.0
    %1371 = vmatmul.mubr.f32.gmra.mrb[0].mxu0 %v1304
    %v1372 = vpop.f32.mrb[0].mxu0
    %v1373 = vadd.f32 0.0, %v1372
    %v1374 = vpop.f32.mrb[0].mxu0
    %1375 = vdwg.mxu0
    %v1377 = vsel %vm808, %v1156, 0
    %1379 = vmatprep.subr.mxu0 0.0
    %1380 = vmatpush1.msra.mxu0 %v807
    %1381 = vmatprep.subr.mxu0 0.0
    %1382 = vmatpush1.msra.mxu0 0.0
    %1383 = vmatprep.subr.mxu0 0.0
    %1384 = vmatpush1.msra.mxu0 0.0
    %1385 = vmatprep.subr.mxu0 0.0
    %1386 = vmatpush1.msra.mxu0 0.0
    %1387 = vmatprep.subr.mxu0 0.0
    %1388 = vmatpush1.msra.mxu0 0.0
    %1389 = vmatprep.subr.mxu0 0.0
    %1390 = vmatpush1.msra.mxu0 0.0
    %1391 = vmatprep.subr.mxu0 0.0
    %1392 = vmatpush1.msra.mxu0 0.0
    %1393 = vmatprep.subr.mxu0 0.0
    %1394 = vmatpush1.msra.mxu0 0.0
    %1395 = vmatprep.subr.mxu0 0.0
    %1396 = vmatpush1.msra.mxu0 0.0
    %1397 = vmatprep.subr.mxu0 0.0
    %1398 = vmatpush1.msra.mxu0 0.0
    %1399 = vmatprep.subr.mxu0 0.0
    %1400 = vmatpush1.msra.mxu0 0.0
    %1401 = vmatprep.subr.mxu0 0.0
    %1402 = vmatpush1.msra.mxu0 0.0
    %1403 = vmatprep.subr.mxu0 0.0
    %1404 = vmatpush1.msra.mxu0 0.0
    %1405 = vmatprep.subr.mxu0 0.0
    %1406 = vmatpush1.msra.mxu0 0.0
    %1407 = vmatprep.subr.mxu0 0.0
    %1408 = vmatpush1.msra.mxu0 0.0
    %1409 = vmatprep.subr.mxu0 0.0
    %1410 = vmatpush1.msra.mxu0 0.0
    %1411 = vmatprep.subr.mxu0 0.0
    %1412 = vmatpush1.msra.mxu0 0.0
    %1413 = vmatprep.subr.mxu0 0.0
    %1414 = vmatpush1.msra.mxu0 0.0
    %1415 = vmatprep.subr.mxu0 0.0
    %1416 = vmatpush1.msra.mxu0 0.0
    %1417 = vmatprep.subr.mxu0 0.0
    %1418 = vmatpush1.msra.mxu0 0.0
    %1419 = vmatprep.subr.mxu0 0.0
    %1420 = vmatpush1.msra.mxu0 0.0
    %1421 = vmatprep.subr.mxu0 0.0
    %1422 = vmatpush1.msra.mxu0 0.0
    %1423 = vmatprep.subr.mxu0 0.0
    %1424 = vmatpush1.msra.mxu0 0.0
    %1425 = vmatprep.subr.mxu0 0.0
    %1426 = vmatpush1.msra.mxu0 0.0
    %1427 = vmatprep.subr.mxu0 0.0
    %1428 = vmatpush1.msra.mxu0 0.0
    %1429 = vmatprep.subr.mxu0 0.0
    %1430 = vmatpush1.msra.mxu0 0.0
    %1431 = vmatprep.subr.mxu0 0.0
    %1432 = vmatpush1.msra.mxu0 0.0
    %1433 = vmatprep.subr.mxu0 0.0
    %1434 = vmatpush1.msra.mxu0 0.0
    %1435 = vmatprep.subr.mxu0 0.0
    %1436 = vmatpush1.msra.mxu0 0.0
    %1437 = vmatprep.subr.mxu0 0.0
    %1438 = vmatpush1.msra.mxu0 0.0
    %1439 = vmatprep.subr.mxu0 0.0
    %1440 = vmatpush1.msra.mxu0 0.0
    %1441 = vmatprep.subr.mxu0 0.0
    %1442 = vmatpush1.msra.mxu0 0.0
    %1443 = vmatprep.mubr.f32.mxu0 0.0
    %1444 = vmatmul.mubr.f32.gmra.mrb[0].mxu0 %v1377
    %v1445 = vpop.f32.mrb[0].mxu0
    %v1446 = vadd.f32 0.0, %v1445
    %v1447 = vpop.f32.mrb[0].mxu0
    %1448 = vdwg.mxu0
    %v1449 = vcombine.low %v1227, %v1373
    %v1450 = vcombine.high %v1227, %v1373
    %v1452 = vunpack.c.l.s4 1983009808
    %v1453 = vunpack.c.0.s8 %v1452
    %v1454 = vlaneseq
    %v1455 = vshrl.u32 %v1454, 7
    %v1456 = vsub.s32 %v1453, %v1455
    %v1457 = vrot.slane %v1449, %v1456
    %v1459 = vunpack.c.l.s4 1983009808
    %v1460 = vunpack.c.0.s8 %v1459
    %v1461 = vlaneseq
    %v1462 = vshrl.u32 %v1461, 7
    %v1463 = vsub.s32 %v1460, %v1462
    %v1464 = vrot.slane %v1450, %v1463
    %v1465 = vcombine.low %v1300, %v1446
    %v1466 = vcombine.high %v1300, %v1446
    %v1468 = vunpack.c.l.s4 1983009808
    %v1469 = vunpack.c.0.s8 %v1468
    %v1470 = vlaneseq
    %v1471 = vshrl.u32 %v1470, 7
    %v1472 = vsub.s32 %v1469, %v1471
    %v1473 = vrot.slane %v1465, %v1472
    %v1475 = vunpack.c.l.s4 1983009808
    %v1476 = vunpack.c.0.s8 %v1475
    %v1477 = vlaneseq
    %v1478 = vshrl.u32 %v1477, 7
    %v1479 = vsub.s32 %v1476, %v1478
    %v1480 = vrot.slane %v1466, %v1479
    %v1481 = vcombine.low %v1457, %v1473
    %v1482 = vcombine.high %v1457, %v1473
    %v1484 = vunpack.c.l.s4 1934713408
    %v1485 = vunpack.c.0.s8 %v1484
    %v1486 = vlaneseq
    %v1487 = vshrl.u32 %v1486, 7
    %v1488 = vsub.s32 %v1485, %v1487
    %v1489 = vrot.slane %v1481, %v1488
    %v1491 = vunpack.c.l.s4 1934713408
    %v1492 = vunpack.c.0.s8 %v1491
    %v1493 = vlaneseq
    %v1494 = vshrl.u32 %v1493, 7
    %v1495 = vsub.s32 %v1492, %v1494
    %v1496 = vrot.slane %v1482, %v1495
    %v1497 = vcombine.low %v1464, %v1480
    %v1498 = vcombine.high %v1464, %v1480
    %v1500 = vunpack.c.l.s4 1934713408
    %v1501 = vunpack.c.0.s8 %v1500
    %v1502 = vlaneseq
    %v1503 = vshrl.u32 %v1502, 7
    %v1504 = vsub.s32 %v1501, %v1503
    %v1505 = vrot.slane %v1497, %v1504
    %v1507 = vunpack.c.l.s4 1934713408
    %v1508 = vunpack.c.0.s8 %v1507
    %v1509 = vlaneseq
    %v1510 = vshrl.u32 %v1509, 7
    %v1511 = vsub.s32 %v1508, %v1510
    %v1512 = vrot.slane %v1498, %v1511
    %v1513 = vcombine.high %v1489, 0.0
    %v1514 = vcombine.high %v1496, 0.0
    %v1515 = vcombine.high %v1505, 0.0
    %v1516 = vcombine.high %v1512, 0.0
    %v1517 = vcombine.low %v1489, %v1496
    %v1519 = vunpack.c.l.s4 1983009808
    %v1520 = vunpack.c.0.s8 %v1519
    %v1521 = vlaneseq
    %v1522 = vshrl.u32 %v1521, 7
    %v1523 = vsub.s32 %v1520, %v1522
    %v1524 = vrot.slane %v1517, %v1523
    %v1525 = vcombine.low %v1513, %v1514
    %v1527 = vunpack.c.l.s4 1983009808
    %v1528 = vunpack.c.0.s8 %v1527
    %v1529 = vlaneseq
    %v1530 = vshrl.u32 %v1529, 7
    %v1531 = vsub.s32 %v1528, %v1530
    %v1532 = vrot.slane %v1525, %v1531
    %v1533 = vcombine.low %v1505, %v1512
    %v1535 = vunpack.c.l.s4 1983009808
    %v1536 = vunpack.c.0.s8 %v1535
    %v1537 = vlaneseq
    %v1538 = vshrl.u32 %v1537, 7
    %v1539 = vsub.s32 %v1536, %v1538
    %v1540 = vrot.slane %v1533, %v1539
    %v1541 = vcombine.low %v1515, %v1516
    %v1543 = vunpack.c.l.s4 1983009808
    %v1544 = vunpack.c.0.s8 %v1543
    %v1545 = vlaneseq
    %v1546 = vshrl.u32 %v1545, 7
    %v1547 = vsub.s32 %v1544, %v1546
    %v1548 = vrot.slane %v1541, %v1547
    %v1549 = vcombine.low %v1524, %v1532
    %v1550 = vcombine.high %v1524, %v1532
    %v1552 = vunpack.c.l.s4 1934713408
    %v1553 = vunpack.c.0.s8 %v1552
    %v1554 = vlaneseq
    %v1555 = vshrl.u32 %v1554, 7
    %v1556 = vsub.s32 %v1553, %v1555
    %v1557 = vrot.slane %v1549, %v1556
    %v1559 = vunpack.c.l.s4 1934713408
    %v1560 = vunpack.c.0.s8 %v1559
    %v1561 = vlaneseq
    %v1562 = vshrl.u32 %v1561, 7
    %v1563 = vsub.s32 %v1560, %v1562
    %v1564 = vrot.slane %v1550, %v1563
    %v1565 = vcombine.low %v1540, %v1548
    %v1566 = vcombine.high %v1540, %v1548
    %v1568 = vunpack.c.l.s4 1934713408
    %v1569 = vunpack.c.0.s8 %v1568
    %v1570 = vlaneseq
    %v1571 = vshrl.u32 %v1570, 7
    %v1572 = vsub.s32 %v1569, %v1571
    %v1573 = vrot.slane %v1565, %v1572
    %v1575 = vunpack.c.l.s4 1934713408
    %v1576 = vunpack.c.0.s8 %v1575
    %v1577 = vlaneseq
    %v1578 = vshrl.u32 %v1577, 7
    %v1579 = vsub.s32 %v1576, %v1578
    %v1580 = vrot.slane %v1566, %v1579
    %v1581 = vcombine.low %v1557, %v1573
    %v1582 = vcombine.high %v1557, %v1573
    %v1583 = vcombine.low %v1564, %v1580
    %v1584 = vcombine.high %v1564, %v1580
    %1586 = vrot.lane.b32.xlu0 %v1582, 8
    %v1587 = vpop.permute.xlu0 %1586
    %1590 = vrot.lane.b32.xlu0 %v1583, 16
    %v1591 = vpop.permute.xlu0 %1590
    %1594 = vrot.lane.b32.xlu0 %v1584, 24
    %v1595 = vpop.permute.xlu0 %1594
    %v1597 = vsel %vm808, %v1581, %v1587
    %vm1598 = vcmask 130048
    %v1599 = vsel %vm1598, %v1597, %v1591
    %vm1600 = vcmask 195584
    %v1601 = vsel %vm1600, %v1599, %v1595
    %1603 = vrot.lane.b32.xlu0 %v369, 120
    %v1604 = vpop.permute.xlu0 %1603
    %1606 = vrot.lane.b32.xlu0 %v369, 112
    %v1607 = vpop.permute.xlu0 %1606
    %1609 = vrot.lane.b32.xlu0 %v369, 104
    %v1610 = vpop.permute.xlu0 %1609
    %v1612 = vcombine.low %v369, %v1607
    %v1613 = vcombine.high %v369, %v1607
    %v1615 = vunpack.c.l.s4 1983009808
    %v1616 = vunpack.c.0.s8 %v1615
    %v1617 = vlaneseq
    %v1618 = vshrl.u32 %v1617, 7
    %v1619 = vsub.s32 %v1616, %v1618
    %v1620 = vrot.slane %v1612, %v1619
    %v1622 = vunpack.c.l.s4 1983009808
    %v1623 = vunpack.c.0.s8 %v1622
    %v1624 = vlaneseq
    %v1625 = vshrl.u32 %v1624, 7
    %v1626 = vsub.s32 %v1623, %v1625
    %v1627 = vrot.slane %v1613, %v1626
    %v1628 = vcombine.low %v1604, %v1610
    %v1629 = vcombine.high %v1604, %v1610
    %v1631 = vunpack.c.l.s4 1983009808
    %v1632 = vunpack.c.0.s8 %v1631
    %v1633 = vlaneseq
    %v1634 = vshrl.u32 %v1633, 7
    %v1635 = vsub.s32 %v1632, %v1634
    %v1636 = vrot.slane %v1628, %v1635
    %v1638 = vunpack.c.l.s4 1983009808
    %v1639 = vunpack.c.0.s8 %v1638
    %v1640 = vlaneseq
    %v1641 = vshrl.u32 %v1640, 7
    %v1642 = vsub.s32 %v1639, %v1641
    %v1643 = vrot.slane %v1629, %v1642
    %v1644 = vcombine.low %v1620, %v1636
    %v1645 = vcombine.high %v1620, %v1636
    %v1647 = vunpack.c.l.s4 1934713408
    %v1648 = vunpack.c.0.s8 %v1647
    %v1649 = vlaneseq
    %v1650 = vshrl.u32 %v1649, 7
    %v1651 = vsub.s32 %v1648, %v1650
    %v1652 = vrot.slane %v1644, %v1651
    %v1654 = vunpack.c.l.s4 1934713408
    %v1655 = vunpack.c.0.s8 %v1654
    %v1656 = vlaneseq
    %v1657 = vshrl.u32 %v1656, 7
    %v1658 = vsub.s32 %v1655, %v1657
    %v1659 = vrot.slane %v1645, %v1658
    %v1660 = vcombine.low %v1627, %v1643
    %v1661 = vcombine.high %v1627, %v1643
    %v1663 = vunpack.c.l.s4 1934713408
    %v1664 = vunpack.c.0.s8 %v1663
    %v1665 = vlaneseq
    %v1666 = vshrl.u32 %v1665, 7
    %v1667 = vsub.s32 %v1664, %v1666
    %v1668 = vrot.slane %v1660, %v1667
    %v1670 = vunpack.c.l.s4 1934713408
    %v1671 = vunpack.c.0.s8 %v1670
    %v1672 = vlaneseq
    %v1673 = vshrl.u32 %v1672, 7
    %v1674 = vsub.s32 %v1671, %v1673
    %v1675 = vrot.slane %v1661, %v1674
    %v1676 = vcombine.high %v1652, 0.0
    %v1677 = vcombine.high %v1659, 0.0
    %v1678 = vcombine.high %v1668, 0.0
    %v1679 = vcombine.high %v1675, 0.0
    %v1680 = vcombine.low %v1652, %v1659
    %v1682 = vunpack.c.l.s4 1983009808
    %v1683 = vunpack.c.0.s8 %v1682
    %v1684 = vlaneseq
    %v1685 = vshrl.u32 %v1684, 7
    %v1686 = vsub.s32 %v1683, %v1685
    %v1687 = vrot.slane %v1680, %v1686
    %v1688 = vcombine.low %v1676, %v1677
    %v1690 = vunpack.c.l.s4 1983009808
    %v1691 = vunpack.c.0.s8 %v1690
    %v1692 = vlaneseq
    %v1693 = vshrl.u32 %v1692, 7
    %v1694 = vsub.s32 %v1691, %v1693
    %v1695 = vrot.slane %v1688, %v1694
    %v1696 = vcombine.low %v1668, %v1675
    %v1698 = vunpack.c.l.s4 1983009808
    %v1699 = vunpack.c.0.s8 %v1698
    %v1700 = vlaneseq
    %v1701 = vshrl.u32 %v1700, 7
    %v1702 = vsub.s32 %v1699, %v1701
    %v1703 = vrot.slane %v1696, %v1702
    %v1704 = vcombine.low %v1678, %v1679
    %v1706 = vunpack.c.l.s4 1983009808
    %v1707 = vunpack.c.0.s8 %v1706
    %v1708 = vlaneseq
    %v1709 = vshrl.u32 %v1708, 7
    %v1710 = vsub.s32 %v1707, %v1709
    %v1711 = vrot.slane %v1704, %v1710
    %v1712 = vcombine.low %v1687, %v1695
    %v1713 = vcombine.high %v1687, %v1695
    %v1715 = vunpack.c.l.s4 1934713408
    %v1716 = vunpack.c.0.s8 %v1715
    %v1717 = vlaneseq
    %v1718 = vshrl.u32 %v1717, 7
    %v1719 = vsub.s32 %v1716, %v1718
    %v1720 = vrot.slane %v1712, %v1719
    %v1722 = vunpack.c.l.s4 1934713408
    %v1723 = vunpack.c.0.s8 %v1722
    %v1724 = vlaneseq
    %v1725 = vshrl.u32 %v1724, 7
    %v1726 = vsub.s32 %v1723, %v1725
    %v1727 = vrot.slane %v1713, %v1726
    %v1728 = vcombine.low %v1703, %v1711
    %v1729 = vcombine.high %v1703, %v1711
    %v1731 = vunpack.c.l.s4 1934713408
    %v1732 = vunpack.c.0.s8 %v1731
    %v1733 = vlaneseq
    %v1734 = vshrl.u32 %v1733, 7
    %v1735 = vsub.s32 %v1732, %v1734
    %v1736 = vrot.slane %v1728, %v1735
    %v1738 = vunpack.c.l.s4 1934713408
    %v1739 = vunpack.c.0.s8 %v1738
    %v1740 = vlaneseq
    %v1741 = vshrl.u32 %v1740, 7
    %v1742 = vsub.s32 %v1739, %v1741
    %v1743 = vrot.slane %v1729, %v1742
    %v1744 = vcombine.low %v1720, %v1736
    %v1745 = vcombine.high %v1720, %v1736
    %v1746 = vcombine.low %v1727, %v1743
    %v1747 = vcombine.high %v1727, %v1743
    %1749 = vrot.lane.b32.xlu0 %v279, 120
    %v1750 = vpop.permute.xlu0 %1749
    %1752 = vrot.lane.b32.xlu0 %v279, 112
    %v1753 = vpop.permute.xlu0 %1752
    %1755 = vrot.lane.b32.xlu0 %v279, 104
    %v1756 = vpop.permute.xlu0 %1755
    %v1758 = vcombine.low %v279, %v1753
    %v1759 = vcombine.high %v279, %v1753
    %v1761 = vunpack.c.l.s4 1983009808
    %v1762 = vunpack.c.0.s8 %v1761
    %v1763 = vlaneseq
    %v1764 = vshrl.u32 %v1763, 7
    %v1765 = vsub.s32 %v1762, %v1764
    %v1766 = vrot.slane %v1758, %v1765
    %v1768 = vunpack.c.l.s4 1983009808
    %v1769 = vunpack.c.0.s8 %v1768
    %v1770 = vlaneseq
    %v1771 = vshrl.u32 %v1770, 7
    %v1772 = vsub.s32 %v1769, %v1771
    %v1773 = vrot.slane %v1759, %v1772
    %v1774 = vcombine.low %v1750, %v1756
    %v1775 = vcombine.high %v1750, %v1756
    %v1777 = vunpack.c.l.s4 1983009808
    %v1778 = vunpack.c.0.s8 %v1777
    %v1779 = vlaneseq
    %v1780 = vshrl.u32 %v1779, 7
    %v1781 = vsub.s32 %v1778, %v1780
    %v1782 = vrot.slane %v1774, %v1781
    %v1784 = vunpack.c.l.s4 1983009808
    %v1785 = vunpack.c.0.s8 %v1784
    %v1786 = vlaneseq
    %v1787 = vshrl.u32 %v1786, 7
    %v1788 = vsub.s32 %v1785, %v1787
    %v1789 = vrot.slane %v1775, %v1788
    %v1790 = vcombine.low %v1766, %v1782
    %v1791 = vcombine.high %v1766, %v1782
    %v1793 = vunpack.c.l.s4 1934713408
    %v1794 = vunpack.c.0.s8 %v1793
    %v1795 = vlaneseq
    %v1796 = vshrl.u32 %v1795, 7
    %v1797 = vsub.s32 %v1794, %v1796
    %v1798 = vrot.slane %v1790, %v1797
    %v1800 = vunpack.c.l.s4 1934713408
    %v1801 = vunpack.c.0.s8 %v1800
    %v1802 = vlaneseq
    %v1803 = vshrl.u32 %v1802, 7
    %v1804 = vsub.s32 %v1801, %v1803
    %v1805 = vrot.slane %v1791, %v1804
    %v1806 = vcombine.low %v1773, %v1789
    %v1807 = vcombine.high %v1773, %v1789
    %v1809 = vunpack.c.l.s4 1934713408
    %v1810 = vunpack.c.0.s8 %v1809
    %v1811 = vlaneseq
    %v1812 = vshrl.u32 %v1811, 7
    %v1813 = vsub.s32 %v1810, %v1812
    %v1814 = vrot.slane %v1806, %v1813
    %v1816 = vunpack.c.l.s4 1934713408
    %v1817 = vunpack.c.0.s8 %v1816
    %v1818 = vlaneseq
    %v1819 = vshrl.u32 %v1818, 7
    %v1820 = vsub.s32 %v1817, %v1819
    %v1821 = vrot.slane %v1807, %v1820
    %v1822 = vcombine.high %v1798, 0.0
    %v1823 = vcombine.high %v1805, 0.0
    %v1824 = vcombine.high %v1814, 0.0
    %v1825 = vcombine.high %v1821, 0.0
    %v1826 = vcombine.low %v1798, %v1805
    %v1828 = vunpack.c.l.s4 1983009808
    %v1829 = vunpack.c.0.s8 %v1828
    %v1830 = vlaneseq
    %v1831 = vshrl.u32 %v1830, 7
    %v1832 = vsub.s32 %v1829, %v1831
    %v1833 = vrot.slane %v1826, %v1832
    %v1834 = vcombine.low %v1822, %v1823
    %v1836 = vunpack.c.l.s4 1983009808
    %v1837 = vunpack.c.0.s8 %v1836
    %v1838 = vlaneseq
    %v1839 = vshrl.u32 %v1838, 7
    %v1840 = vsub.s32 %v1837, %v1839
    %v1841 = vrot.slane %v1834, %v1840
    %v1842 = vcombine.low %v1814, %v1821
    %v1844 = vunpack.c.l.s4 1983009808
    %v1845 = vunpack.c.0.s8 %v1844
    %v1846 = vlaneseq
    %v1847 = vshrl.u32 %v1846, 7
    %v1848 = vsub.s32 %v1845, %v1847
    %v1849 = vrot.slane %v1842, %v1848
    %v1850 = vcombine.low %v1824, %v1825
    %v1852 = vunpack.c.l.s4 1983009808
    %v1853 = vunpack.c.0.s8 %v1852
    %v1854 = vlaneseq
    %v1855 = vshrl.u32 %v1854, 7
    %v1856 = vsub.s32 %v1853, %v1855
    %v1857 = vrot.slane %v1850, %v1856
    %v1858 = vcombine.low %v1833, %v1841
    %v1859 = vcombine.high %v1833, %v1841
    %v1861 = vunpack.c.l.s4 1934713408
    %v1862 = vunpack.c.0.s8 %v1861
    %v1863 = vlaneseq
    %v1864 = vshrl.u32 %v1863, 7
    %v1865 = vsub.s32 %v1862, %v1864
    %v1866 = vrot.slane %v1858, %v1865
    %v1868 = vunpack.c.l.s4 1934713408
    %v1869 = vunpack.c.0.s8 %v1868
    %v1870 = vlaneseq
    %v1871 = vshrl.u32 %v1870, 7
    %v1872 = vsub.s32 %v1869, %v1871
    %v1873 = vrot.slane %v1859, %v1872
    %v1874 = vcombine.low %v1849, %v1857
    %v1875 = vcombine.high %v1849, %v1857
    %v1877 = vunpack.c.l.s4 1934713408
    %v1878 = vunpack.c.0.s8 %v1877
    %v1879 = vlaneseq
    %v1880 = vshrl.u32 %v1879, 7
    %v1881 = vsub.s32 %v1878, %v1880
    %v1882 = vrot.slane %v1874, %v1881
    %v1884 = vunpack.c.l.s4 1934713408
    %v1885 = vunpack.c.0.s8 %v1884
    %v1886 = vlaneseq
    %v1887 = vshrl.u32 %v1886, 7
    %v1888 = vsub.s32 %v1885, %v1887
    %v1889 = vrot.slane %v1875, %v1888
    %v1890 = vcombine.low %v1866, %v1882
    %v1891 = vcombine.high %v1866, %v1882
    %v1892 = vcombine.low %v1873, %v1889
    %v1893 = vcombine.high %v1873, %v1889
    %1895 = vrot.lane.b32.xlu0 %v365, 120
    %v1896 = vpop.permute.xlu0 %1895
    %1898 = vrot.lane.b32.xlu0 %v365, 112
    %v1899 = vpop.permute.xlu0 %1898
    %1901 = vrot.lane.b32.xlu0 %v365, 104
    %v1902 = vpop.permute.xlu0 %1901
    %v1904 = vcombine.low %v365, %v1899
    %v1905 = vcombine.high %v365, %v1899
    %v1907 = vunpack.c.l.s4 1983009808
    %v1908 = vunpack.c.0.s8 %v1907
    %v1909 = vlaneseq
    %v1910 = vshrl.u32 %v1909, 7
    %v1911 = vsub.s32 %v1908, %v1910
    %v1912 = vrot.slane %v1904, %v1911
    %v1914 = vunpack.c.l.s4 1983009808
    %v1915 = vunpack.c.0.s8 %v1914
    %v1916 = vlaneseq
    %v1917 = vshrl.u32 %v1916, 7
    %v1918 = vsub.s32 %v1915, %v1917
    %v1919 = vrot.slane %v1905, %v1918
    %v1920 = vcombine.low %v1896, %v1902
    %v1921 = vcombine.high %v1896, %v1902
    %v1923 = vunpack.c.l.s4 1983009808
    %v1924 = vunpack.c.0.s8 %v1923
    %v1925 = vlaneseq
    %v1926 = vshrl.u32 %v1925, 7
    %v1927 = vsub.s32 %v1924, %v1926
    %v1928 = vrot.slane %v1920, %v1927
    %v1930 = vunpack.c.l.s4 1983009808
    %v1931 = vunpack.c.0.s8 %v1930
    %v1932 = vlaneseq
    %v1933 = vshrl.u32 %v1932, 7
    %v1934 = vsub.s32 %v1931, %v1933
    %v1935 = vrot.slane %v1921, %v1934
    %v1936 = vcombine.low %v1912, %v1928
    %v1937 = vcombine.high %v1912, %v1928
    %v1939 = vunpack.c.l.s4 1934713408
    %v1940 = vunpack.c.0.s8 %v1939
    %v1941 = vlaneseq
    %v1942 = vshrl.u32 %v1941, 7
    %v1943 = vsub.s32 %v1940, %v1942
    %v1944 = vrot.slane %v1936, %v1943
    %v1946 = vunpack.c.l.s4 1934713408
    %v1947 = vunpack.c.0.s8 %v1946
    %v1948 = vlaneseq
    %v1949 = vshrl.u32 %v1948, 7
    %v1950 = vsub.s32 %v1947, %v1949
    %v1951 = vrot.slane %v1937, %v1950
    %v1952 = vcombine.low %v1919, %v1935
    %v1953 = vcombine.high %v1919, %v1935
    %v1955 = vunpack.c.l.s4 1934713408
    %v1956 = vunpack.c.0.s8 %v1955
    %v1957 = vlaneseq
    %v1958 = vshrl.u32 %v1957, 7
    %v1959 = vsub.s32 %v1956, %v1958
    %v1960 = vrot.slane %v1952, %v1959
    %v1962 = vunpack.c.l.s4 1934713408
    %v1963 = vunpack.c.0.s8 %v1962
    %v1964 = vlaneseq
    %v1965 = vshrl.u32 %v1964, 7
    %v1966 = vsub.s32 %v1963, %v1965
    %v1967 = vrot.slane %v1953, %v1966
    %v1968 = vcombine.high %v1944, 0.0
    %v1969 = vcombine.high %v1951, 0.0
    %v1970 = vcombine.high %v1960, 0.0
    %v1971 = vcombine.high %v1967, 0.0
    %v1972 = vcombine.low %v1944, %v1951
    %v1974 = vunpack.c.l.s4 1983009808
    %v1975 = vunpack.c.0.s8 %v1974
    %v1976 = vlaneseq
    %v1977 = vshrl.u32 %v1976, 7
    %v1978 = vsub.s32 %v1975, %v1977
    %v1979 = vrot.slane %v1972, %v1978
    %v1980 = vcombine.low %v1968, %v1969
    %v1982 = vunpack.c.l.s4 1983009808
    %v1983 = vunpack.c.0.s8 %v1982
    %v1984 = vlaneseq
    %v1985 = vshrl.u32 %v1984, 7
    %v1986 = vsub.s32 %v1983, %v1985
    %v1987 = vrot.slane %v1980, %v1986
    %v1988 = vcombine.low %v1960, %v1967
    %v1990 = vunpack.c.l.s4 1983009808
    %v1991 = vunpack.c.0.s8 %v1990
    %v1992 = vlaneseq
    %v1993 = vshrl.u32 %v1992, 7
    %v1994 = vsub.s32 %v1991, %v1993
    %v1995 = vrot.slane %v1988, %v1994
    %v1996 = vcombine.low %v1970, %v1971
    %v1998 = vunpack.c.l.s4 1983009808
    %v1999 = vunpack.c.0.s8 %v1998
    %v2000 = vlaneseq
    %v2001 = vshrl.u32 %v2000, 7
    %v2002 = vsub.s32 %v1999, %v2001
    %v2003 = vrot.slane %v1996, %v2002
    %v2004 = vcombine.low %v1979, %v1987
    %v2005 = vcombine.high %v1979, %v1987
    %v2007 = vunpack.c.l.s4 1934713408
    %v2008 = vunpack.c.0.s8 %v2007
    %v2009 = vlaneseq
    %v2010 = vshrl.u32 %v2009, 7
    %v2011 = vsub.s32 %v2008, %v2010
    %v2012 = vrot.slane %v2004, %v2011
    %v2014 = vunpack.c.l.s4 1934713408
    %v2015 = vunpack.c.0.s8 %v2014
    %v2016 = vlaneseq
    %v2017 = vshrl.u32 %v2016, 7
    %v2018 = vsub.s32 %v2015, %v2017
    %v2019 = vrot.slane %v2005, %v2018
    %v2020 = vcombine.low %v1995, %v2003
    %v2021 = vcombine.high %v1995, %v2003
    %v2023 = vunpack.c.l.s4 1934713408
    %v2024 = vunpack.c.0.s8 %v2023
    %v2025 = vlaneseq
    %v2026 = vshrl.u32 %v2025, 7
    %v2027 = vsub.s32 %v2024, %v2026
    %v2028 = vrot.slane %v2020, %v2027
    %v2030 = vunpack.c.l.s4 1934713408
    %v2031 = vunpack.c.0.s8 %v2030
    %v2032 = vlaneseq
    %v2033 = vshrl.u32 %v2032, 7
    %v2034 = vsub.s32 %v2031, %v2033
    %v2035 = vrot.slane %v2021, %v2034
    %v2036 = vcombine.low %v2012, %v2028
    %v2037 = vcombine.high %v2012, %v2028
    %v2038 = vcombine.low %v2019, %v2035
    %v2039 = vcombine.high %v2019, %v2035
    %v2041 = vsel %vm808, %v1744, 0
    %v2044 = vsel %vm808, %v1890, 0
    %2046 = vmatprep.subr.mxu0 0.0
    %2047 = vmatpush1.xpose.msra.mxu0 %v2044
    %2048 = vmatprep.subr.mxu0 0.0
    %2049 = vmatpush1.xpose.msra.mxu0 0.0
    %2050 = vmatprep.subr.mxu0 0.0
    %2051 = vmatpush1.xpose.msra.mxu0 0.0
    %2052 = vmatprep.subr.mxu0 0.0
    %2053 = vmatpush1.xpose.msra.mxu0 0.0
    %2054 = vmatprep.subr.mxu0 0.0
    %2055 = vmatpush1.xpose.msra.mxu0 0.0
    %2056 = vmatprep.subr.mxu0 0.0
    %2057 = vmatpush1.xpose.msra.mxu0 0.0
    %2058 = vmatprep.subr.mxu0 0.0
    %2059 = vmatpush1.xpose.msra.mxu0 0.0
    %2060 = vmatprep.subr.mxu0 0.0
    %2061 = vmatpush1.xpose.msra.mxu0 0.0
    %2062 = vmatprep.subr.mxu0 0.0
    %2063 = vmatpush1.xpose.msra.mxu0 0.0
    %2064 = vmatprep.subr.mxu0 0.0
    %2065 = vmatpush1.xpose.msra.mxu0 0.0
    %2066 = vmatprep.subr.mxu0 0.0
    %2067 = vmatpush1.xpose.msra.mxu0 0.0
    %2068 = vmatprep.subr.mxu0 0.0
    %2069 = vmatpush1.xpose.msra.mxu0 0.0
    %2070 = vmatprep.subr.mxu0 0.0
    %2071 = vmatpush1.xpose.msra.mxu0 0.0
    %2072 = vmatprep.subr.mxu0 0.0
    %2073 = vmatpush1.xpose.msra.mxu0 0.0
    %2074 = vmatprep.subr.mxu0 0.0
    %2075 = vmatpush1.xpose.msra.mxu0 0.0
    %2076 = vmatprep.subr.mxu0 0.0
    %2077 = vmatpush1.xpose.msra.mxu0 0.0
    %2078 = vmatprep.subr.mxu0 0.0
    %2079 = vmatpush1.xpose.msra.mxu0 0.0
    %2080 = vmatprep.subr.mxu0 0.0
    %2081 = vmatpush1.xpose.msra.mxu0 0.0
    %2082 = vmatprep.subr.mxu0 0.0
    %2083 = vmatpush1.xpose.msra.mxu0 0.0
    %2084 = vmatprep.subr.mxu0 0.0
    %2085 = vmatpush1.xpose.msra.mxu0 0.0
    %2086 = vmatprep.subr.mxu0 0.0
    %2087 = vmatpush1.xpose.msra.mxu0 0.0
    %2088 = vmatprep.subr.mxu0 0.0
    %2089 = vmatpush1.xpose.msra.mxu0 0.0
    %2090 = vmatprep.subr.mxu0 0.0
    %2091 = vmatpush1.xpose.msra.mxu0 0.0
    %2092 = vmatprep.subr.mxu0 0.0
    %2093 = vmatpush1.xpose.msra.mxu0 0.0
    %2094 = vmatprep.subr.mxu0 0.0
    %2095 = vmatpush1.xpose.msra.mxu0 0.0
    %2096 = vmatprep.subr.mxu0 0.0
    %2097 = vmatpush1.xpose.msra.mxu0 0.0
    %2098 = vmatprep.subr.mxu0 0.0
    %2099 = vmatpush1.xpose.msra.mxu0 0.0
    %2100 = vmatprep.subr.mxu0 0.0
    %2101 = vmatpush1.xpose.msra.mxu0 0.0
    %2102 = vmatprep.subr.mxu0 0.0
    %2103 = vmatpush1.xpose.msra.mxu0 0.0
    %2104 = vmatprep.subr.mxu0 0.0
    %2105 = vmatpush1.xpose.msra.mxu0 0.0
    %2106 = vmatprep.subr.mxu0 0.0
    %2107 = vmatpush1.xpose.msra.mxu0 0.0
    %2108 = vmatprep.subr.mxu0 0.0
    %2109 = vmatpush1.xpose.msra.mxu0 0.0
    %2110 = vmatprep.mubr.f32.mxu0 0.0
    %2111 = vmatmul.mubr.f32.gmra.mrb[0].mxu0 %v2041
    %v2112 = vpop.f32.mrb[0].mxu0
    %v2113 = vadd.f32 0.0, %v2112
    %v2114 = vpop.f32.mrb[0].mxu0
    %2115 = vdwg.mxu0
    %v2117 = vsel %vm808, %v1745, 0
    %v2120 = vsel %vm808, %v1891, 0
    %2122 = vmatprep.subr.mxu0 0.0
    %2123 = vmatpush1.xpose.msra.mxu0 %v2120
    %2124 = vmatprep.subr.mxu0 0.0
    %2125 = vmatpush1.xpose.msra.mxu0 0.0
    %2126 = vmatprep.subr.mxu0 0.0
    %2127 = vmatpush1.xpose.msra.mxu0 0.0
    %2128 = vmatprep.subr.mxu0 0.0
    %2129 = vmatpush1.xpose.msra.mxu0 0.0
    %2130 = vmatprep.subr.mxu0 0.0
    %2131 = vmatpush1.xpose.msra.mxu0 0.0
    %2132 = vmatprep.subr.mxu0 0.0
    %2133 = vmatpush1.xpose.msra.mxu0 0.0
    %2134 = vmatprep.subr.mxu0 0.0
    %2135 = vmatpush1.xpose.msra.mxu0 0.0
    %2136 = vmatprep.subr.mxu0 0.0
    %2137 = vmatpush1.xpose.msra.mxu0 0.0
    %2138 = vmatprep.subr.mxu0 0.0
    %2139 = vmatpush1.xpose.msra.mxu0 0.0
    %2140 = vmatprep.subr.mxu0 0.0
    %2141 = vmatpush1.xpose.msra.mxu0 0.0
    %2142 = vmatprep.subr.mxu0 0.0
    %2143 = vmatpush1.xpose.msra.mxu0 0.0
    %2144 = vmatprep.subr.mxu0 0.0
    %2145 = vmatpush1.xpose.msra.mxu0 0.0
    %2146 = vmatprep.subr.mxu0 0.0
    %2147 = vmatpush1.xpose.msra.mxu0 0.0
    %2148 = vmatprep.subr.mxu0 0.0
    %2149 = vmatpush1.xpose.msra.mxu0 0.0
    %2150 = vmatprep.subr.mxu0 0.0
    %2151 = vmatpush1.xpose.msra.mxu0 0.0
    %2152 = vmatprep.subr.mxu0 0.0
    %2153 = vmatpush1.xpose.msra.mxu0 0.0
    %2154 = vmatprep.subr.mxu0 0.0
    %2155 = vmatpush1.xpose.msra.mxu0 0.0
    %2156 = vmatprep.subr.mxu0 0.0
    %2157 = vmatpush1.xpose.msra.mxu0 0.0
    %2158 = vmatprep.subr.mxu0 0.0
    %2159 = vmatpush1.xpose.msra.mxu0 0.0
    %2160 = vmatprep.subr.mxu0 0.0
    %2161 = vmatpush1.xpose.msra.mxu0 0.0
    %2162 = vmatprep.subr.mxu0 0.0
    %2163 = vmatpush1.xpose.msra.mxu0 0.0
    %2164 = vmatprep.subr.mxu0 0.0
    %2165 = vmatpush1.xpose.msra.mxu0 0.0
    %2166 = vmatprep.subr.mxu0 0.0
    %2167 = vmatpush1.xpose.msra.mxu0 0.0
    %2168 = vmatprep.subr.mxu0 0.0
    %2169 = vmatpush1.xpose.msra.mxu0 0.0
    %2170 = vmatprep.subr.mxu0 0.0
    %2171 = vmatpush1.xpose.msra.mxu0 0.0
    %2172 = vmatprep.subr.mxu0 0.0
    %2173 = vmatpush1.xpose.msra.mxu0 0.0
    %2174 = vmatprep.subr.mxu0 0.0
    %2175 = vmatpush1.xpose.msra.mxu0 0.0
    %2176 = vmatprep.subr.mxu0 0.0
    %2177 = vmatpush1.xpose.msra.mxu0 0.0
    %2178 = vmatprep.subr.mxu0 0.0
    %2179 = vmatpush1.xpose.msra.mxu0 0.0
    %2180 = vmatprep.subr.mxu0 0.0
    %2181 = vmatpush1.xpose.msra.mxu0 0.0
    %2182 = vmatprep.subr.mxu0 0.0
    %2183 = vmatpush1.xpose.msra.mxu0 0.0
    %2184 = vmatprep.subr.mxu0 0.0
    %2185 = vmatpush1.xpose.msra.mxu0 0.0
    %2186 = vmatprep.mubr.f32.mxu0 0.0
    %2187 = vmatmul.mubr.f32.gmra.mrb[0].mxu0 %v2117
    %v2188 = vpop.f32.mrb[0].mxu0
    %v2189 = vadd.f32 0.0, %v2188
    %v2190 = vpop.f32.mrb[0].mxu0
    %2191 = vdwg.mxu0
    %v2193 = vsel %vm808, %v1746, 0
    %v2196 = vsel %vm808, %v1892, 0
    %2198 = vmatprep.subr.mxu0 0.0
    %2199 = vmatpush1.xpose.msra.mxu0 %v2196
    %2200 = vmatprep.subr.mxu0 0.0
    %2201 = vmatpush1.xpose.msra.mxu0 0.0
    %2202 = vmatprep.subr.mxu0 0.0
    %2203 = vmatpush1.xpose.msra.mxu0 0.0
    %2204 = vmatprep.subr.mxu0 0.0
    %2205 = vmatpush1.xpose.msra.mxu0 0.0
    %2206 = vmatprep.subr.mxu0 0.0
    %2207 = vmatpush1.xpose.msra.mxu0 0.0
    %2208 = vmatprep.subr.mxu0 0.0
    %2209 = vmatpush1.xpose.msra.mxu0 0.0
    %2210 = vmatprep.subr.mxu0 0.0
    %2211 = vmatpush1.xpose.msra.mxu0 0.0
    %2212 = vmatprep.subr.mxu0 0.0
    %2213 = vmatpush1.xpose.msra.mxu0 0.0
    %2214 = vmatprep.subr.mxu0 0.0
    %2215 = vmatpush1.xpose.msra.mxu0 0.0
    %2216 = vmatprep.subr.mxu0 0.0
    %2217 = vmatpush1.xpose.msra.mxu0 0.0
    %2218 = vmatprep.subr.mxu0 0.0
    %2219 = vmatpush1.xpose.msra.mxu0 0.0
    %2220 = vmatprep.subr.mxu0 0.0
    %2221 = vmatpush1.xpose.msra.mxu0 0.0
    %2222 = vmatprep.subr.mxu0 0.0
    %2223 = vmatpush1.xpose.msra.mxu0 0.0
    %2224 = vmatprep.subr.mxu0 0.0
    %2225 = vmatpush1.xpose.msra.mxu0 0.0
    %2226 = vmatprep.subr.mxu0 0.0
    %2227 = vmatpush1.xpose.msra.mxu0 0.0
    %2228 = vmatprep.subr.mxu0 0.0
    %2229 = vmatpush1.xpose.msra.mxu0 0.0
    %2230 = vmatprep.subr.mxu0 0.0
    %2231 = vmatpush1.xpose.msra.mxu0 0.0
    %2232 = vmatprep.subr.mxu0 0.0
    %2233 = vmatpush1.xpose.msra.mxu0 0.0
    %2234 = vmatprep.subr.mxu0 0.0
    %2235 = vmatpush1.xpose.msra.mxu0 0.0
    %2236 = vmatprep.subr.mxu0 0.0
    %2237 = vmatpush1.xpose.msra.mxu0 0.0
    %2238 = vmatprep.subr.mxu0 0.0
    %2239 = vmatpush1.xpose.msra.mxu0 0.0
    %2240 = vmatprep.subr.mxu0 0.0
    %2241 = vmatpush1.xpose.msra.mxu0 0.0
    %2242 = vmatprep.subr.mxu0 0.0
    %2243 = vmatpush1.xpose.msra.mxu0 0.0
    %2244 = vmatprep.subr.mxu0 0.0
    %2245 = vmatpush1.xpose.msra.mxu0 0.0
    %2246 = vmatprep.subr.mxu0 0.0
    %2247 = vmatpush1.xpose.msra.mxu0 0.0
    %2248 = vmatprep.subr.mxu0 0.0
    %2249 = vmatpush1.xpose.msra.mxu0 0.0
    %2250 = vmatprep.subr.mxu0 0.0
    %2251 = vmatpush1.xpose.msra.mxu0 0.0
    %2252 = vmatprep.subr.mxu0 0.0
    %2253 = vmatpush1.xpose.msra.mxu0 0.0
    %2254 = vmatprep.subr.mxu0 0.0
    %2255 = vmatpush1.xpose.msra.mxu0 0.0
    %2256 = vmatprep.subr.mxu0 0.0
    %2257 = vmatpush1.xpose.msra.mxu0 0.0
    %2258 = vmatprep.subr.mxu0 0.0
    %2259 = vmatpush1.xpose.msra.mxu0 0.0
    %2260 = vmatprep.subr.mxu0 0.0
    %2261 = vmatpush1.xpose.msra.mxu0 0.0
    %2262 = vmatprep.mubr.f32.mxu0 0.0
    %2263 = vmatmul.mubr.f32.gmra.mrb[0].mxu0 %v2193
    %v2264 = vpop.f32.mrb[0].mxu0
    %v2265 = vadd.f32 0.0, %v2264
    %v2266 = vpop.f32.mrb[0].mxu0
    %2267 = vdwg.mxu0
    %v2269 = vsel %vm808, %v1747, 0
    %v2272 = vsel %vm808, %v1893, 0
    %2274 = vmatprep.subr.mxu0 0.0
    %2275 = vmatpush1.xpose.msra.mxu0 %v2272
    %2276 = vmatprep.subr.mxu0 0.0
    %2277 = vmatpush1.xpose.msra.mxu0 0.0
    %2278 = vmatprep.subr.mxu0 0.0
    %2279 = vmatpush1.xpose.msra.mxu0 0.0
    %2280 = vmatprep.subr.mxu0 0.0
    %2281 = vmatpush1.xpose.msra.mxu0 0.0
    %2282 = vmatprep.subr.mxu0 0.0
    %2283 = vmatpush1.xpose.msra.mxu0 0.0
    %2284 = vmatprep.subr.mxu0 0.0
    %2285 = vmatpush1.xpose.msra.mxu0 0.0
    %2286 = vmatprep.subr.mxu0 0.0
    %2287 = vmatpush1.xpose.msra.mxu0 0.0
    %2288 = vmatprep.subr.mxu0 0.0
    %2289 = vmatpush1.xpose.msra.mxu0 0.0
    %2290 = vmatprep.subr.mxu0 0.0
    %2291 = vmatpush1.xpose.msra.mxu0 0.0
    %2292 = vmatprep.subr.mxu0 0.0
    %2293 = vmatpush1.xpose.msra.mxu0 0.0
    %2294 = vmatprep.subr.mxu0 0.0
    %2295 = vmatpush1.xpose.msra.mxu0 0.0
    %2296 = vmatprep.subr.mxu0 0.0
    %2297 = vmatpush1.xpose.msra.mxu0 0.0
    %2298 = vmatprep.subr.mxu0 0.0
    %2299 = vmatpush1.xpose.msra.mxu0 0.0
    %2300 = vmatprep.subr.mxu0 0.0
    %2301 = vmatpush1.xpose.msra.mxu0 0.0
    %2302 = vmatprep.subr.mxu0 0.0
    %2303 = vmatpush1.xpose.msra.mxu0 0.0
    %2304 = vmatprep.subr.mxu0 0.0
    %2305 = vmatpush1.xpose.msra.mxu0 0.0
    %2306 = vmatprep.subr.mxu0 0.0
    %2307 = vmatpush1.xpose.msra.mxu0 0.0
    %2308 = vmatprep.subr.mxu0 0.0
    %2309 = vmatpush1.xpose.msra.mxu0 0.0
    %2310 = vmatprep.subr.mxu0 0.0
    %2311 = vmatpush1.xpose.msra.mxu0 0.0
    %2312 = vmatprep.subr.mxu0 0.0
    %2313 = vmatpush1.xpose.msra.mxu0 0.0
    %2314 = vmatprep.subr.mxu0 0.0
    %2315 = vmatpush1.xpose.msra.mxu0 0.0
    %2316 = vmatprep.subr.mxu0 0.0
    %2317 = vmatpush1.xpose.msra.mxu0 0.0
    %2318 = vmatprep.subr.mxu0 0.0
    %2319 = vmatpush1.xpose.msra.mxu0 0.0
    %2320 = vmatprep.subr.mxu0 0.0
    %2321 = vmatpush1.xpose.msra.mxu0 0.0
    %2322 = vmatprep.subr.mxu0 0.0
    %2323 = vmatpush1.xpose.msra.mxu0 0.0
    %2324 = vmatprep.subr.mxu0 0.0
    %2325 = vmatpush1.xpose.msra.mxu0 0.0
    %2326 = vmatprep.subr.mxu0 0.0
    %2327 = vmatpush1.xpose.msra.mxu0 0.0
    %2328 = vmatprep.subr.mxu0 0.0
    %2329 = vmatpush1.xpose.msra.mxu0 0.0
    %2330 = vmatprep.subr.mxu0 0.0
    %2331 = vmatpush1.xpose.msra.mxu0 0.0
    %2332 = vmatprep.subr.mxu0 0.0
    %2333 = vmatpush1.xpose.msra.mxu0 0.0
    %2334 = vmatprep.subr.mxu0 0.0
    %2335 = vmatpush1.xpose.msra.mxu0 0.0
    %2336 = vmatprep.subr.mxu0 0.0
    %2337 = vmatpush1.xpose.msra.mxu0 0.0
    %2338 = vmatprep.mubr.f32.mxu0 0.0
    %2339 = vmatmul.mubr.f32.gmra.mrb[0].mxu0 %v2269
    %v2340 = vpop.f32.mrb[0].mxu0
    %v2341 = vadd.f32 0.0, %v2340
    %v2342 = vpop.f32.mrb[0].mxu0
    %2343 = vdwg.mxu0
    %v2344 = vsel %vm808, %v2113, -inf
    %2345 = vmax.xlane.f32.xlu0 %v2344
    %v2346 = vpop.xlane.xlu0 %2345
    %v2347 = vsel %vm808, %v2189, -inf
    %2348 = vmax.xlane.f32.xlu0 %v2347
    %v2349 = vpop.xlane.xlu0 %2348
    %v2350 = vsel %vm808, %v2265, -inf
    %2351 = vmax.xlane.f32.xlu0 %v2350
    %v2352 = vpop.xlane.xlu0 %2351
    %v2353 = vsel %vm808, %v2341, -inf
    %2354 = vmax.xlane.f32.xlu0 %v2353
    %v2355 = vpop.xlane.xlu0 %2354
    %v2356 = vsub.f32 %v2113, %v2346
    %v2357 = vsub.f32 %v2189, %v2349
    %v2358 = vsub.f32 %v2265, %v2352
    %v2359 = vsub.f32 %v2341, %v2355
    %v2360 = vmul.f32 %v2356, 1.442695
    %v2361 = vpow.pop %v2360
    %v2362 = vmul.f32 %v2357, 1.442695
    %v2363 = vpow.pop %v2362
    %v2364 = vmul.f32 %v2358, 1.442695
    %v2365 = vpow.pop %v2364
    %v2366 = vmul.f32 %v2359, 1.442695
    %v2367 = vpow.pop %v2366
    %v2368 = vsel %vm808, %v2361, 0.0
    %2369 = vadd.xlane.f32.xlu0 %v2368
    %v2370 = vpop.xlane.xlu0 %2369
    %v2371 = vsel %vm808, %v2363, 0.0
    %2372 = vadd.xlane.f32.xlu0 %v2371
    %v2373 = vpop.xlane.xlu0 %2372
    %v2374 = vsel %vm808, %v2365, 0.0
    %2375 = vadd.xlane.f32.xlu0 %v2374
    %v2376 = vpop.xlane.xlu0 %2375
    %v2377 = vsel %vm808, %v2367, 0.0
    %2378 = vadd.xlane.f32.xlu0 %v2377
    %v2379 = vpop.xlane.xlu0 %2378
    %v2380 = vrcp.pop %v2370
    %v2381 = vrcp.pop %v2373
    %v2382 = vrcp.pop %v2376
    %v2383 = vrcp.pop %v2379
    %v2384 = vmul.f32 %v2361, %v2380
    %v2385 = vmul.f32 %v2363, %v2381
    %v2386 = vmul.f32 %v2365, %v2382
    %v2387 = vmul.f32 %v2367, %v2383
    %v2389 = vsel %vm808, %v2384, 0
    %2391 = vmatprep.subr.mxu0 0.0
    %2392 = vmatpush1.msra.mxu0 %v2036
    %2393 = vmatprep.subr.mxu0 0.0
    %2394 = vmatpush1.msra.mxu0 0.0
    %2395 = vmatprep.subr.mxu0 0.0
    %2396 = vmatpush1.msra.mxu0 0.0
    %2397 = vmatprep.subr.mxu0 0.0
    %2398 = vmatpush1.msra.mxu0 0.0
    %2399 = vmatprep.subr.mxu0 0.0
    %2400 = vmatpush1.msra.mxu0 0.0
    %2401 = vmatprep.subr.mxu0 0.0
    %2402 = vmatpush1.msra.mxu0 0.0
    %2403 = vmatprep.subr.mxu0 0.0
    %2404 = vmatpush1.msra.mxu0 0.0
    %2405 = vmatprep.subr.mxu0 0.0
    %2406 = vmatpush1.msra.mxu0 0.0
    %2407 = vmatprep.subr.mxu0 0.0
    %2408 = vmatpush1.msra.mxu0 0.0
    %2409 = vmatprep.subr.mxu0 0.0
    %2410 = vmatpush1.msra.mxu0 0.0
    %2411 = vmatprep.subr.mxu0 0.0
    %2412 = vmatpush1.msra.mxu0 0.0
    %2413 = vmatprep.subr.mxu0 0.0
    %2414 = vmatpush1.msra.mxu0 0.0
    %2415 = vmatprep.subr.mxu0 0.0
    %2416 = vmatpush1.msra.mxu0 0.0
    %2417 = vmatprep.subr.mxu0 0.0
    %2418 = vmatpush1.msra.mxu0 0.0
    %2419 = vmatprep.subr.mxu0 0.0
    %2420 = vmatpush1.msra.mxu0 0.0
    %2421 = vmatprep.subr.mxu0 0.0
    %2422 = vmatpush1.msra.mxu0 0.0
    %2423 = vmatprep.subr.mxu0 0.0
    %2424 = vmatpush1.msra.mxu0 0.0
    %2425 = vmatprep.subr.mxu0 0.0
    %2426 = vmatpush1.msra.mxu0 0.0
    %2427 = vmatprep.subr.mxu0 0.0
    %2428 = vmatpush1.msra.mxu0 0.0
    %2429 = vmatprep.subr.mxu0 0.0
    %2430 = vmatpush1.msra.mxu0 0.0
    %2431 = vmatprep.subr.mxu0 0.0
    %2432 = vmatpush1.msra.mxu0 0.0
    %2433 = vmatprep.subr.mxu0 0.0
    %2434 = vmatpush1.msra.mxu0 0.0
    %2435 = vmatprep.subr.mxu0 0.0
    %2436 = vmatpush1.msra.mxu0 0.0
    %2437 = vmatprep.subr.mxu0 0.0
    %2438 = vmatpush1.msra.mxu0 0.0
    %2439 = vmatprep.subr.mxu0 0.0
    %2440 = vmatpush1.msra.mxu0 0.0
    %2441 = vmatprep.subr.mxu0 0.0
    %2442 = vmatpush1.msra.mxu0 0.0
    %2443 = vmatprep.subr.mxu0 0.0
    %2444 = vmatpush1.msra.mxu0 0.0
    %2445 = vmatprep.subr.mxu0 0.0
    %2446 = vmatpush1.msra.mxu0 0.0
    %2447 = vmatprep.subr.mxu0 0.0
    %2448 = vmatpush1.msra.mxu0 0.0
    %2449 = vmatprep.subr.mxu0 0.0
    %2450 = vmatpush1.msra.mxu0 0.0
    %2451 = vmatprep.subr.mxu0 0.0
    %2452 = vmatpush1.msra.mxu0 0.0
    %2453 = vmatprep.subr.mxu0 0.0
    %2454 = vmatpush1.msra.mxu0 0.0
    %2455 = vmatprep.mubr.f32.mxu0 0.0
    %2456 = vmatmul.mubr.f32.gmra.mrb[0].mxu0 %v2389
    %v2457 = vpop.f32.mrb[0].mxu0
    %v2458 = vadd.f32 0.0, %v2457
    %v2459 = vpop.f32.mrb[0].mxu0
    %2460 = vdwg.mxu0
    %v2462 = vsel %vm808, %v2385, 0
    %2464 = vmatprep.subr.mxu0 0.0
    %2465 = vmatpush1.msra.mxu0 %v2037
    %2466 = vmatprep.subr.mxu0 0.0
    %2467 = vmatpush1.msra.mxu0 0.0
    %2468 = vmatprep.subr.mxu0 0.0
    %2469 = vmatpush1.msra.mxu0 0.0
    %2470 = vmatprep.subr.mxu0 0.0
    %2471 = vmatpush1.msra.mxu0 0.0
    %2472 = vmatprep.subr.mxu0 0.0
    %2473 = vmatpush1.msra.mxu0 0.0
    %2474 = vmatprep.subr.mxu0 0.0
    %2475 = vmatpush1.msra.mxu0 0.0
    %2476 = vmatprep.subr.mxu0 0.0
    %2477 = vmatpush1.msra.mxu0 0.0
    %2478 = vmatprep.subr.mxu0 0.0
    %2479 = vmatpush1.msra.mxu0 0.0
    %2480 = vmatprep.subr.mxu0 0.0
    %2481 = vmatpush1.msra.mxu0 0.0
    %2482 = vmatprep.subr.mxu0 0.0
    %2483 = vmatpush1.msra.mxu0 0.0
    %2484 = vmatprep.subr.mxu0 0.0
    %2485 = vmatpush1.msra.mxu0 0.0
    %2486 = vmatprep.subr.mxu0 0.0
    %2487 = vmatpush1.msra.mxu0 0.0
    %2488 = vmatprep.subr.mxu0 0.0
    %2489 = vmatpush1.msra.mxu0 0.0
    %2490 = vmatprep.subr.mxu0 0.0
    %2491 = vmatpush1.msra.mxu0 0.0
    %2492 = vmatprep.subr.mxu0 0.0
    %2493 = vmatpush1.msra.mxu0 0.0
    %2494 = vmatprep.subr.mxu0 0.0
    %2495 = vmatpush1.msra.mxu0 0.0
    %2496 = vmatprep.subr.mxu0 0.0
    %2497 = vmatpush1.msra.mxu0 0.0
    %2498 = vmatprep.subr.mxu0 0.0
    %2499 = vmatpush1.msra.mxu0 0.0
    %2500 = vmatprep.subr.mxu0 0.0
    %2501 = vmatpush1.msra.mxu0 0.0
    %2502 = vmatprep.subr.mxu0 0.0
    %2503 = vmatpush1.msra.mxu0 0.0
    %2504 = vmatprep.subr.mxu0 0.0
    %2505 = vmatpush1.msra.mxu0 0.0
    %2506 = vmatprep.subr.mxu0 0.0
    %2507 = vmatpush1.msra.mxu0 0.0
    %2508 = vmatprep.subr.mxu0 0.0
    %2509 = vmatpush1.msra.mxu0 0.0
    %2510 = vmatprep.subr.mxu0 0.0
    %2511 = vmatpush1.msra.mxu0 0.0
    %2512 = vmatprep.subr.mxu0 0.0
    %2513 = vmatpush1.msra.mxu0 0.0
    %2514 = vmatprep.subr.mxu0 0.0
    %2515 = vmatpush1.msra.mxu0 0.0
    %2516 = vmatprep.subr.mxu0 0.0
    %2517 = vmatpush1.msra.mxu0 0.0
    %2518 = vmatprep.subr.mxu0 0.0
    %2519 = vmatpush1.msra.mxu0 0.0
    %2520 = vmatprep.subr.mxu0 0.0
    %2521 = vmatpush1.msra.mxu0 0.0
    %2522 = vmatprep.subr.mxu0 0.0
    %2523 = vmatpush1.msra.mxu0 0.0
    %2524 = vmatprep.subr.mxu0 0.0
    %2525 = vmatpush1.msra.mxu0 0.0
    %2526 = vmatprep.subr.mxu0 0.0
    %2527 = vmatpush1.msra.mxu0 0.0
    %2528 = vmatprep.mubr.f32.mxu0 0.0
    %2529 = vmatmul.mubr.f32.gmra.mrb[0].mxu0 %v2462
    %v2530 = vpop.f32.mrb[0].mxu0
    %v2531 = vadd.f32 0.0, %v2530
    %v2532 = vpop.f32.mrb[0].mxu0
    %2533 = vdwg.mxu0
    %v2535 = vsel %vm808, %v2386, 0
    %2537 = vmatprep.subr.mxu0 0.0
    %2538 = vmatpush1.msra.mxu0 %v2038
    %2539 = vmatprep.subr.mxu0 0.0
    %2540 = vmatpush1.msra.mxu0 0.0
    %2541 = vmatprep.subr.mxu0 0.0
    %2542 = vmatpush1.msra.mxu0 0.0
    %2543 = vmatprep.subr.mxu0 0.0
    %2544 = vmatpush1.msra.mxu0 0.0
    %2545 = vmatprep.subr.mxu0 0.0
    %2546 = vmatpush1.msra.mxu0 0.0
    %2547 = vmatprep.subr.mxu0 0.0
    %2548 = vmatpush1.msra.mxu0 0.0
    %2549 = vmatprep.subr.mxu0 0.0
    %2550 = vmatpush1.msra.mxu0 0.0
    %2551 = vmatprep.subr.mxu0 0.0
    %2552 = vmatpush1.msra.mxu0 0.0
    %2553 = vmatprep.subr.mxu0 0.0
    %2554 = vmatpush1.msra.mxu0 0.0
    %2555 = vmatprep.subr.mxu0 0.0
    %2556 = vmatpush1.msra.mxu0 0.0
    %2557 = vmatprep.subr.mxu0 0.0
    %2558 = vmatpush1.msra.mxu0 0.0
    %2559 = vmatprep.subr.mxu0 0.0
    %2560 = vmatpush1.msra.mxu0 0.0
    %2561 = vmatprep.subr.mxu0 0.0
    %2562 = vmatpush1.msra.mxu0 0.0
    %2563 = vmatprep.subr.mxu0 0.0
    %2564 = vmatpush1.msra.mxu0 0.0
    %2565 = vmatprep.subr.mxu0 0.0
    %2566 = vmatpush1.msra.mxu0 0.0
    %2567 = vmatprep.subr.mxu0 0.0
    %2568 = vmatpush1.msra.mxu0 0.0
    %2569 = vmatprep.subr.mxu0 0.0
    %2570 = vmatpush1.msra.mxu0 0.0
    %2571 = vmatprep.subr.mxu0 0.0
    %2572 = vmatpush1.msra.mxu0 0.0
    %2573 = vmatprep.subr.mxu0 0.0
    %2574 = vmatpush1.msra.mxu0 0.0
    %2575 = vmatprep.subr.mxu0 0.0
    %2576 = vmatpush1.msra.mxu0 0.0
    %2577 = vmatprep.subr.mxu0 0.0
    %2578 = vmatpush1.msra.mxu0 0.0
    %2579 = vmatprep.subr.mxu0 0.0
    %2580 = vmatpush1.msra.mxu0 0.0
    %2581 = vmatprep.subr.mxu0 0.0
    %2582 = vmatpush1.msra.mxu0 0.0
    %2583 = vmatprep.subr.mxu0 0.0
    %2584 = vmatpush1.msra.mxu0 0.0
    %2585 = vmatprep.subr.mxu0 0.0
    %2586 = vmatpush1.msra.mxu0 0.0
    %2587 = vmatprep.subr.mxu0 0.0
    %2588 = vmatpush1.msra.mxu0 0.0
    %2589 = vmatprep.subr.mxu0 0.0
    %2590 = vmatpush1.msra.mxu0 0.0
    %2591 = vmatprep.subr.mxu0 0.0
    %2592 = vmatpush1.msra.mxu0 0.0
    %2593 = vmatprep.subr.mxu0 0.0
    %2594 = vmatpush1.msra.mxu0 0.0
    %2595 = vmatprep.subr.mxu0 0.0
    %2596 = vmatpush1.msra.mxu0 0.0
    %2597 = vmatprep.subr.mxu0 0.0
    %2598 = vmatpush1.msra.mxu0 0.0
    %2599 = vmatprep.subr.mxu0 0.0
    %2600 = vmatpush1.msra.mxu0 0.0
    %2601 = vmatprep.mubr.f32.mxu0 0.0
    %2602 = vmatmul.mubr.f32.gmra.mrb[0].mxu0 %v2535
    %v2603 = vpop.f32.mrb[0].mxu0
    %v2604 = vadd.f32 0.0, %v2603
    %v2605 = vpop.f32.mrb[0].mxu0
    %2606 = vdwg.mxu0
    %v2608 = vsel %vm808, %v2387, 0
    %2610 = vmatprep.subr.mxu0 0.0
    %2611 = vmatpush1.msra.mxu0 %v2039
    %2612 = vmatprep.subr.mxu0 0.0
    %2613 = vmatpush1.msra.mxu0 0.0
    %2614 = vmatprep.subr.mxu0 0.0
    %2615 = vmatpush1.msra.mxu0 0.0
    %2616 = vmatprep.subr.mxu0 0.0
    %2617 = vmatpush1.msra.mxu0 0.0
    %2618 = vmatprep.subr.mxu0 0.0
    %2619 = vmatpush1.msra.mxu0 0.0
    %2620 = vmatprep.subr.mxu0 0.0
    %2621 = vmatpush1.msra.mxu0 0.0
    %2622 = vmatprep.subr.mxu0 0.0
    %2623 = vmatpush1.msra.mxu0 0.0
    %2624 = vmatprep.subr.mxu0 0.0
    %2625 = vmatpush1.msra.mxu0 0.0
    %2626 = vmatprep.subr.mxu0 0.0
    %2627 = vmatpush1.msra.mxu0 0.0
    %2628 = vmatprep.subr.mxu0 0.0
    %2629 = vmatpush1.msra.mxu0 0.0
    %2630 = vmatprep.subr.mxu0 0.0
    %2631 = vmatpush1.msra.mxu0 0.0
    %2632 = vmatprep.subr.mxu0 0.0
    %2633 = vmatpush1.msra.mxu0 0.0
    %2634 = vmatprep.subr.mxu0 0.0
    %2635 = vmatpush1.msra.mxu0 0.0
    %2636 = vmatprep.subr.mxu0 0.0
    %2637 = vmatpush1.msra.mxu0 0.0
    %2638 = vmatprep.subr.mxu0 0.0
    %2639 = vmatpush1.msra.mxu0 0.0
    %2640 = vmatprep.subr.mxu0 0.0
    %2641 = vmatpush1.msra.mxu0 0.0
    %2642 = vmatprep.subr.mxu0 0.0
    %2643 = vmatpush1.msra.mxu0 0.0
    %2644 = vmatprep.subr.mxu0 0.0
    %2645 = vmatpush1.msra.mxu0 0.0
    %2646 = vmatprep.subr.mxu0 0.0
    %2647 = vmatpush1.msra.mxu0 0.0
    %2648 = vmatprep.subr.mxu0 0.0
    %2649 = vmatpush1.msra.mxu0 0.0
    %2650 = vmatprep.subr.mxu0 0.0
    %2651 = vmatpush1.msra.mxu0 0.0
    %2652 = vmatprep.subr.mxu0 0.0
    %2653 = vmatpush1.msra.mxu0 0.0
    %2654 = vmatprep.subr.mxu0 0.0
    %2655 = vmatpush1.msra.mxu0 0.0
    %2656 = vmatprep.subr.mxu0 0.0
    %2657 = vmatpush1.msra.mxu0 0.0
    %2658 = vmatprep.subr.mxu0 0.0
    %2659 = vmatpush1.msra.mxu0 0.0
    %2660 = vmatprep.subr.mxu0 0.0
    %2661 = vmatpush1.msra.mxu0 0.0
    %2662 = vmatprep.subr.mxu0 0.0
    %2663 = vmatpush1.msra.mxu0 0.0
    %2664 = vmatprep.subr.mxu0 0.0
    %2665 = vmatpush1.msra.mxu0 0.0
    %2666 = vmatprep.subr.mxu0 0.0
    %2667 = vmatpush1.msra.mxu0 0.0
    %2668 = vmatprep.subr.mxu0 0.0
    %2669 = vmatpush1.msra.mxu0 0.0
    %2670 = vmatprep.subr.mxu0 0.0
    %2671 = vmatpush1.msra.mxu0 0.0
    %2672 = vmatprep.subr.mxu0 0.0
    %2673 = vmatpush1.msra.mxu0 0.0
    %2674 = vmatprep.mubr.f32.mxu0 0.0
    %2675 = vmatmul.mubr.f32.gmra.mrb[0].mxu0 %v2608
    %v2676 = vpop.f32.mrb[0].mxu0
    %v2677 = vadd.f32 0.0, %v2676
    %v2678 = vpop.f32.mrb[0].mxu0
    %2679 = vdwg.mxu0
    %v2680 = vcombine.low %v2458, %v2604
    %v2681 = vcombine.high %v2458, %v2604
    %v2683 = vunpack.c.l.s4 1983009808
    %v2684 = vunpack.c.0.s8 %v2683
    %v2685 = vlaneseq
    %v2686 = vshrl.u32 %v2685, 7
    %v2687 = vsub.s32 %v2684, %v2686
    %v2688 = vrot.slane %v2680, %v2687
    %v2690 = vunpack.c.l.s4 1983009808
    %v2691 = vunpack.c.0.s8 %v2690
    %v2692 = vlaneseq
    %v2693 = vshrl.u32 %v2692, 7
    %v2694 = vsub.s32 %v2691, %v2693
    %v2695 = vrot.slane %v2681, %v2694
    %v2696 = vcombine.low %v2531, %v2677
    %v2697 = vcombine.high %v2531, %v2677
    %v2699 = vunpack.c.l.s4 1983009808
    %v2700 = vunpack.c.0.s8 %v2699
    %v2701 = vlaneseq
    %v2702 = vshrl.u32 %v2701, 7
    %v2703 = vsub.s32 %v2700, %v2702
    %v2704 = vrot.slane %v2696, %v2703
    %v2706 = vunpack.c.l.s4 1983009808
    %v2707 = vunpack.c.0.s8 %v2706
    %v2708 = vlaneseq
    %v2709 = vshrl.u32 %v2708, 7
    %v2710 = vsub.s32 %v2707, %v2709
    %v2711 = vrot.slane %v2697, %v2710
    %v2712 = vcombine.low %v2688, %v2704
    %v2713 = vcombine.high %v2688, %v2704
    %v2715 = vunpack.c.l.s4 1934713408
    %v2716 = vunpack.c.0.s8 %v2715
    %v2717 = vlaneseq
    %v2718 = vshrl.u32 %v2717, 7
    %v2719 = vsub.s32 %v2716, %v2718
    %v2720 = vrot.slane %v2712, %v2719
    %v2722 = vunpack.c.l.s4 1934713408
    %v2723 = vunpack.c.0.s8 %v2722
    %v2724 = vlaneseq
    %v2725 = vshrl.u32 %v2724, 7
    %v2726 = vsub.s32 %v2723, %v2725
    %v2727 = vrot.slane %v2713, %v2726
    %v2728 = vcombine.low %v2695, %v2711
    %v2729 = vcombine.high %v2695, %v2711
    %v2731 = vunpack.c.l.s4 1934713408
    %v2732 = vunpack.c.0.s8 %v2731
    %v2733 = vlaneseq
    %v2734 = vshrl.u32 %v2733, 7
    %v2735 = vsub.s32 %v2732, %v2734
    %v2736 = vrot.slane %v2728, %v2735
    %v2738 = vunpack.c.l.s4 1934713408
    %v2739 = vunpack.c.0.s8 %v2738
    %v2740 = vlaneseq
    %v2741 = vshrl.u32 %v2740, 7
    %v2742 = vsub.s32 %v2739, %v2741
    %v2743 = vrot.slane %v2729, %v2742
    %v2744 = vcombine.high %v2720, 0.0
    %v2745 = vcombine.high %v2727, 0.0
    %v2746 = vcombine.high %v2736, 0.0
    %v2747 = vcombine.high %v2743, 0.0
    %v2748 = vcombine.low %v2720, %v2727
    %v2750 = vunpack.c.l.s4 1983009808
    %v2751 = vunpack.c.0.s8 %v2750
    %v2752 = vlaneseq
    %v2753 = vshrl.u32 %v2752, 7
    %v2754 = vsub.s32 %v2751, %v2753
    %v2755 = vrot.slane %v2748, %v2754
    %v2756 = vcombine.low %v2744, %v2745
    %v2758 = vunpack.c.l.s4 1983009808
    %v2759 = vunpack.c.0.s8 %v2758
    %v2760 = vlaneseq
    %v2761 = vshrl.u32 %v2760, 7
    %v2762 = vsub.s32 %v2759, %v2761
    %v2763 = vrot.slane %v2756, %v2762
    %v2764 = vcombine.low %v2736, %v2743
    %v2766 = vunpack.c.l.s4 1983009808
    %v2767 = vunpack.c.0.s8 %v2766
    %v2768 = vlaneseq
    %v2769 = vshrl.u32 %v2768, 7
    %v2770 = vsub.s32 %v2767, %v2769
    %v2771 = vrot.slane %v2764, %v2770
    %v2772 = vcombine.low %v2746, %v2747
    %v2774 = vunpack.c.l.s4 1983009808
    %v2775 = vunpack.c.0.s8 %v2774
    %v2776 = vlaneseq
    %v2777 = vshrl.u32 %v2776, 7
    %v2778 = vsub.s32 %v2775, %v2777
    %v2779 = vrot.slane %v2772, %v2778
    %v2780 = vcombine.low %v2755, %v2763
    %v2781 = vcombine.high %v2755, %v2763
    %v2783 = vunpack.c.l.s4 1934713408
    %v2784 = vunpack.c.0.s8 %v2783
    %v2785 = vlaneseq
    %v2786 = vshrl.u32 %v2785, 7
    %v2787 = vsub.s32 %v2784, %v2786
    %v2788 = vrot.slane %v2780, %v2787
    %v2790 = vunpack.c.l.s4 1934713408
    %v2791 = vunpack.c.0.s8 %v2790
    %v2792 = vlaneseq
    %v2793 = vshrl.u32 %v2792, 7
    %v2794 = vsub.s32 %v2791, %v2793
    %v2795 = vrot.slane %v2781, %v2794
    %v2796 = vcombine.low %v2771, %v2779
    %v2797 = vcombine.high %v2771, %v2779
    %v2799 = vunpack.c.l.s4 1934713408
    %v2800 = vunpack.c.0.s8 %v2799
    %v2801 = vlaneseq
    %v2802 = vshrl.u32 %v2801, 7
    %v2803 = vsub.s32 %v2800, %v2802
    %v2804 = vrot.slane %v2796, %v2803
    %v2806 = vunpack.c.l.s4 1934713408
    %v2807 = vunpack.c.0.s8 %v2806
    %v2808 = vlaneseq
    %v2809 = vshrl.u32 %v2808, 7
    %v2810 = vsub.s32 %v2807, %v2809
    %v2811 = vrot.slane %v2797, %v2810
    %v2812 = vcombine.low %v2788, %v2804
    %v2813 = vcombine.high %v2788, %v2804
    %v2814 = vcombine.low %v2795, %v2811
    %v2815 = vcombine.high %v2795, %v2811
    %2817 = vrot.lane.b32.xlu0 %v2813, 8
    %v2818 = vpop.permute.xlu0 %2817
    %2821 = vrot.lane.b32.xlu0 %v2814, 16
    %v2822 = vpop.permute.xlu0 %2821
    %2825 = vrot.lane.b32.xlu0 %v2815, 24
    %v2826 = vpop.permute.xlu0 %2825
    %v2828 = vsel %vm808, %v2812, %v2818
    %v2829 = vsel %vm1598, %v2828, %v2822
    %v2830 = vsel %vm1600, %v2829, %v2826
    %v2831 = vld [vmem:[#allocation10] sm:$0xff]
    %v2832 = vld [vmem:[#allocation10 + $0x8] sm:$0xff]
    %v2833 = vld [vmem:[#allocation10 + $0x10] sm:$0xff]
    %v2834 = vld [vmem:[#allocation10 + $0x18] sm:$0xff]
    %v2835 = vld [vmem:[%s8] sm:$0x1]
    %v2837 = vlaneseq
    %v2838 = vshrl.u32 %v2837, 7
    %v2839 = vsub.s32 0, %v2838
    %v2840 = vrot.slane %v2835, %v2839
    %v2843 = vsel %vm114, %v1601, 0
    %v2846 = vsel %vm114, %v2830, 0
    %2848 = vmatprep.subr.mxu0 0.0
    %2849 = vmatpush1.msra.mxu0 %v2831
    %2850 = vmatprep.subr.mxu0 0.0
    %2851 = vmatpush1.msra.mxu0 %v2832
    %2852 = vmatprep.subr.mxu0 0.0
    %2853 = vmatpush1.msra.mxu0 %v2833
    %2854 = vmatprep.subr.mxu0 0.0
    %2855 = vmatpush1.msra.mxu0 %v2834
    %2856 = vmatprep.subr.mxu0 0.0
    %2857 = vmatpush1.msra.mxu0 0.0
    %2858 = vmatprep.subr.mxu0 0.0
    %2859 = vmatpush1.msra.mxu0 0.0
    %2860 = vmatprep.subr.mxu0 0.0
    %2861 = vmatpush1.msra.mxu0 0.0
    %2862 = vmatprep.subr.mxu0 0.0
    %2863 = vmatpush1.msra.mxu0 0.0
    %2864 = vmatprep.subr.mxu0 0.0
    %2865 = vmatpush1.msra.mxu0 0.0
    %2866 = vmatprep.subr.mxu0 0.0
    %2867 = vmatpush1.msra.mxu0 0.0
    %2868 = vmatprep.subr.mxu0 0.0
    %2869 = vmatpush1.msra.mxu0 0.0
    %2870 = vmatprep.subr.mxu0 0.0
    %2871 = vmatpush1.msra.mxu0 0.0
    %2872 = vmatprep.subr.mxu0 0.0
    %2873 = vmatpush1.msra.mxu0 0.0
    %2874 = vmatprep.subr.mxu0 0.0
    %2875 = vmatpush1.msra.mxu0 0.0
    %2876 = vmatprep.subr.mxu0 0.0
    %2877 = vmatpush1.msra.mxu0 0.0
    %2878 = vmatprep.subr.mxu0 0.0
    %2879 = vmatpush1.msra.mxu0 0.0
    %2880 = vmatprep.subr.mxu0 0.0
    %2881 = vmatpush1.msra.mxu0 0.0
    %2882 = vmatprep.subr.mxu0 0.0
    %2883 = vmatpush1.msra.mxu0 0.0
    %2884 = vmatprep.subr.mxu0 0.0
    %2885 = vmatpush1.msra.mxu0 0.0
    %2886 = vmatprep.subr.mxu0 0.0
    %2887 = vmatpush1.msra.mxu0 0.0
    %2888 = vmatprep.subr.mxu0 0.0
    %2889 = vmatpush1.msra.mxu0 0.0
    %2890 = vmatprep.subr.mxu0 0.0
    %2891 = vmatpush1.msra.mxu0 0.0
    %2892 = vmatprep.subr.mxu0 0.0
    %2893 = vmatpush1.msra.mxu0 0.0
    %2894 = vmatprep.subr.mxu0 0.0
    %2895 = vmatpush1.msra.mxu0 0.0
    %2896 = vmatprep.subr.mxu0 0.0
    %2897 = vmatpush1.msra.mxu0 0.0
    %2898 = vmatprep.subr.mxu0 0.0
    %2899 = vmatpush1.msra.mxu0 0.0
    %2900 = vmatprep.subr.mxu0 0.0
    %2901 = vmatpush1.msra.mxu0 0.0
    %2902 = vmatprep.subr.mxu0 0.0
    %2903 = vmatpush1.msra.mxu0 0.0
    %2904 = vmatprep.subr.mxu0 0.0
    %2905 = vmatpush1.msra.mxu0 0.0
    %2906 = vmatprep.subr.mxu0 0.0
    %2907 = vmatpush1.msra.mxu0 0.0
    %2908 = vmatprep.subr.mxu0 0.0
    %2909 = vmatpush1.msra.mxu0 0.0
    %2910 = vmatprep.subr.mxu0 0.0
    %2911 = vmatpush1.msra.mxu0 0.0
    %2912 = vmatprep.mubr.f32.mxu0 0.0
    %2913 = vmatmul.mubr.f32.gmra.mrb[0].mxu0 %v2843
    %v2914 = vpop.f32.mrb[0].mxu0
    %v2915 = vadd.f32 %v2840, %v2914
    %v2916 = vpop.f32.mrb[0].mxu0
    %2917 = vmatprep.mubr.f32.mxu0 0.0
    %2918 = vmatmul.mubr.f32.gmra.mrb[0].mxu0 %v2846
    %v2919 = vpop.f32.mrb[0].mxu0
    %v2920 = vadd.f32 %v2840, %v2919
    %v2921 = vpop.f32.mrb[0].mxu0
    %2922 = vdwg.mxu0
    %2923 = vst.msk [vmem:[#allocation11] sm:$0xff] %vm114, %v2915
    %2924 = vst.msk [vmem:[#allocation11 + $0x8] sm:$0xff] %vm114, %v2920
    // Predicated region
    $region58: #{tpu_custom_call.1} parent=1 // pred_check
      _
    $region59: #{tpu_custom_call.1} parent=1 // pred_check_branch
      %2926 = sbr.rel (0) target = $region61
    $region60: #{tpu_custom_call.1} parent=1 // pred_region
      %s2928 = ssub.s32 256, 256
      %2929 = vsyncadd [#allocation4], %s2928
      %s2930 = sshll.u32 [#allocation11], 4
      %s2931 = int_to_ptr.vmem [resolvable:$true] %s2930
      %2936 = dma.vmem_to_hbm [thread:$0]  %s2931, 256, %s9, [#allocation4], 128, 128, 8
    $region61: #{tpu_custom_call.1} parent=1 // pred_fallthru
      _
    // Predicated region
    $region62: #{tpu_custom_call.1} parent=1 // pred_check
      _
    $region63: #{tpu_custom_call.1} parent=1 // pred_check_branch
      %2938 = sbr.rel (0) target = $region65
    $region64: #{tpu_custom_call.1} parent=1 // pred_region
      %2939 = dma.done [#allocation4], 256
    $region65: #{tpu_custom_call.1} parent=1 // pred_fallthru
      _
    %2940 = vsyncpa [#allocation3], 1
    %2941 = vsyncpa [#allocation6], 1
    %2942 = vsyncpa [#allocation9], 1
    %2943 = vsyncpa [#allocation4], 1

</llo_original>
